<compile_context>
chip_gen: v7x
topology: tpu7x:2x2x1
jax: 0.10.0
libtpu: 0.0.40
codegen_flags: <defaults>
</compile_context>

<pallas_src>
import functools

import jax
import jax.numpy as jnp
from jax.experimental import pallas as pl
from jax.experimental.pallas import tpu as pltpu


def _fusion_kernel(src_ref, prj_ref, depth_ref,
                   w1t_ref, w2t_ref, bc_ref, wft_ref, bf_ref,
                   out_ref, *, total_p, ragged):
    # src_ref/prj_ref: (1, V, C, TP)   depth_ref: (1, V, TP)
    # w1t/w2t/wft: (C, C) = W^T in feature dtype;  bc/bf: (C, 1) f32
    # out_ref: (1, C, TP)
    V = src_ref.shape[1]
    TP = src_ref.shape[3]

    # Depth-gated view weights (f32 on VPU/EUP).  Tail pixels of a partial boundary
    # block are masked here so garbage depths can never contribute.
    dep = depth_ref[0].astype(jnp.float32)                          # (V, TP)
    valid = dep > 0.0
    if ragged:
        col = (jax.lax.broadcasted_iota(jnp.int32, (V, TP), 1)
               + pl.program_id(1) * TP)
        valid = jnp.logical_and(valid, col < total_p)
    gate = jnp.where(valid, jnp.exp(-dep), 0.0)                     # (V, TP)
    inv_den = pl.reciprocal(jnp.sum(gate, axis=0, keepdims=True) + 1e-6,
                            approx=True)                            # (1, TP) on EUP

    # BlockCAT (cat -> 1x1 conv -> ReLU) + gated accumulate, one view at a time.
    acc = None
    for v in range(V):
        cat_v = jnp.dot(w1t_ref[...], src_ref[0, v],
                        preferred_element_type=jnp.float32)
        cat_v = cat_v + jnp.dot(w2t_ref[...], prj_ref[0, v],
                                preferred_element_type=jnp.float32)
        cat_v = jnp.maximum(cat_v + bc_ref[...], 0.0)               # (C, TP) f32
        term = gate[v:v + 1, :] * cat_v
        acc = term if acc is None else acc + term                   # (C, TP) f32

    # Final 1x1 conv; the per-pixel 1/den scaling commutes with the left matmul.
    out = jnp.dot(wft_ref[...], acc.astype(wft_ref.dtype),
                  preferred_element_type=jnp.float32)
    out = out * inv_den + bf_ref[...]                               # (C, TP)
    out_ref[0] = out.astype(out_ref.dtype)


def _vmem_capacity_bytes():
    try:
        cap = getattr(pltpu.get_tpu_info(), "vmem_capacity_bytes", None)
        if cap:
            return int(cap)
    except Exception:
        pass
    return 64 << 20          # conservative fallback (v7x physical VMEM)


def fusion_inner(prj_feats, prj_src_feats, prj_depths, params, *, tile_p=2048):
    """prj_feats/prj_src_feats: (B, V, C, H, W); prj_depths: (B, V, H, W) -> (B, C, H, W)."""
    B, V, C, H, W = prj_src_feats.shape
    assert prj_feats.shape == (B, V, C, H, W)
    assert prj_depths.shape == (B, V, H, W)
    P = H * W

    feat_dtype = prj_src_feats.dtype
    f_size = jnp.dtype(feat_dtype).itemsize
    d_size = jnp.dtype(prj_depths.dtype).itemsize

    # NCHW stays NCHW: pure reshapes (no HBM transpose passes); P lands on the lane axis.
    src = prj_src_feats.reshape(B, V, C, P)
    prj = prj_feats.astype(feat_dtype).reshape(B, V, C, P)
    dep = prj_depths.reshape(B, V, P)

    # ---- generation-aware VMEM budget --------------------------------------------------
    cap = _vmem_capacity_bytes()
    if cap > (96 << 20):                  # v5e / v6e: 128 MiB physical VMEM
        budget, limit_cap = 88 << 20, 100 << 20
    else:                                 # v7x: 64 MiB physical VMEM -> leave headroom
        budget, limit_cap = 40 << 20, 52 << 20

    def vmem_bytes(tp):
        nbuf = 2                                               # double-buffered blocks
        feats = nbuf * 2 * V * C * tp * f_size                 # src + prj
        depth = nbuf * V * tp * d_size
        outb = nbuf * C * tp * f_size
        weights = nbuf * (3 * C * C * f_size + 2 * C * 4)
        temps = (2 * C + V + 4) * tp * 4                       # f32 cat_v / acc / gate / den
        internal = 4 << 20                                     # Mosaic internal scratch
        return feats + depth + outb + weights + temps + internal

    # Largest lane-aligned tile inside the budget.
    tp = max(128, (int(tile_p) // 128) * 128)
    while tp > 128 and vmem_bytes(tp) > budget:
        tp -= 128

    # Keep the output block lane-dense (multiple of 128) unless P itself is smaller.
    if P % 128 == 0:
        tp = min(tp, P)
    elif P < 128:
        tp = P                               # full-extent block is the only legal choice
    else:
        tp = min(tp, (P // 128) * 128)       # last grid step is a partial boundary block

    # v7x has 2 TensorCores sharded over the parallel grid axes: keep >= 2 grid steps.
    while B * pl.cdiv(P, tp) < 2 and tp >= 256 and tp % 256 == 0:
        tp //= 2

    ragged = (P % tp) != 0
    grid = (B, pl.cdiv(P, tp))

    # Host-side weight prep (tiny): transposed for out = W^T @ X on (C, tp) tiles.
    w1t = params["w1"].T.astype(feat_dtype)                    # (C, C)
    w2t = params["w2"].T.astype(feat_dtype)                    # (C, C)
    wft = params["wf"].T.astype(feat_dtype)                    # (C, C)
    bc = params["bc"].reshape(C, 1).astype(jnp.float32)
    bf = params["bf"].reshape(C, 1).astype(jnp.float32)

    flops = int(2 * B * P * C * C * (2 * V + 1))
    transcendentals = int(B * P * (V + 1))
    bytes_accessed = int(2 * B * V * C * P * f_size + B * V * P * d_size
                         + B * C * P * f_size + 3 * C * C * f_size + 2 * C * 4)
    vmem_limit = int(min(max(vmem_bytes(tp) + (4 << 20), 32 << 20), limit_cap))

    kernel = functools.partial(_fusion_kernel, total_p=P, ragged=ragged)

    out = pl.pallas_call(
        kernel,
        out_shape=jax.ShapeDtypeStruct((B, C, P), feat_dtype),
        grid_spec=pl.GridSpec(
            grid=grid,
            in_specs=[
                pl.BlockSpec((1, V, C, tp), lambda b, p: (b, 0, 0, p)),   # src
                pl.BlockSpec((1, V, C, tp), lambda b, p: (b, 0, 0, p)),   # prj
                pl.BlockSpec((1, V, tp), lambda b, p: (b, 0, p)),         # depth
                pl.BlockSpec((C, C), lambda b, p: (0, 0)),                # w1^T
                pl.BlockSpec((C, C), lambda b, p: (0, 0)),                # w2^T
                pl.BlockSpec((C, 1), lambda b, p: (0, 0)),                # bc
                pl.BlockSpec((C, C), lambda b, p: (0, 0)),                # wf^T
                pl.BlockSpec((C, 1), lambda b, p: (0, 0)),                # bf
            ],
            out_specs=pl.BlockSpec((1, C, tp), lambda b, p: (b, 0, p)),
        ),
        compiler_params=pltpu.CompilerParams(
            dimension_semantics=("parallel", "parallel"),
            vmem_limit_bytes=vmem_limit),
        cost_estimate=pl.CostEstimate(
            flops=flops, transcendentals=transcendentals,
            bytes_accessed=bytes_accessed),
    )(src, prj, dep, w1t, w2t, bc, wft, bf)

    return out.reshape(B, C, H, W)          # pure reshape, still NCHW


def _reference(prj_feats, prj_src_feats, prj_depths, params):
    """Pure-JAX f32 reference of the same inferred semantics (for validation)."""
    B, V, C, H, W = prj_src_feats.shape
    src = prj_src_feats.astype(jnp.float32)
    prj = prj_feats.astype(jnp.float32)
    dep = prj_depths.astype(jnp.float32)
    w1 = params["w1"].astype(jnp.float32)
    w2 = params["w2"].astype(jnp.float32)
    wf = params["wf"].astype(jnp.float32)
    bc = params["bc"].astype(jnp.float32).reshape(1, 1, C, 1, 1)
    bf = params["bf"].astype(jnp.float32).reshape(1, C, 1, 1)

    cat = (jnp.einsum('bvchw,cd->bvdhw', src, w1)
           + jnp.einsum('bvchw,cd->bvdhw', prj, w2) + bc)
    cat = jnp.maximum(cat, 0.0)
    g = jnp.where(dep > 0.0, jnp.exp(-dep), 0.0)                   # (B, V, H, W)
    den = jnp.sum(g, axis=1) + 1e-6                                # (B, H, W)
    fused = jnp.sum(g[:, :, None] * cat, axis=1) / den[:, None]    # (B, C, H, W)
    out = jnp.einsum('bchw,cd->bdhw', fused, wf) + bf
    return out.astype(prj_src_feats.dtype)


def init_params(dim, key, dtype=jnp.float32):
    k1, k2, k3, k4, k5 = jax.random.split(key, 5)
    scale = 1.0 / jnp.sqrt(jnp.float32(dim))
    return {
        # BlockCAT 1x1 conv over concatenated channels, split into two (C, C) halves
        "w1": (jax.random.normal(k1, (dim, dim), jnp.float32) * scale).astype(dtype),
        "w2": (jax.random.normal(k2, (dim, dim), jnp.float32) * scale).astype(dtype),
        "bc": jax.random.normal(k4, (dim,), jnp.float32) * 0.1,
        # ViLViewFuseLayer 1x1 conv
        "wf": (jax.random.normal(k3, (dim, dim), jnp.float32) * scale).astype(dtype),
        "bf": jax.random.normal(k5, (dim,), jnp.float32) * 0.1,
    }


if __name__ == "__main__":
    B, V, C, H, W = 2, 3, 32, 16, 16
    key = jax.random.PRNGKey(0)
    kf, ks, kd, kp = jax.random.split(key, 4)

    # bf16 activations/weights (halves HBM traffic; MXU accumulates in f32).
    prj_feats = jax.random.normal(kf, (B, V, C, H, W), jnp.float32).astype(jnp.bfloat16)
    prj_src_feats = jax.random.normal(ks, (B, V, C, H, W), jnp.float32).astype(jnp.bfloat16)
    # depths in [0, 1.7); zeros act as "invalid projection" mask
    prj_depths = jnp.maximum(
        jax.random.uniform(kd, (B, V, H, W), jnp.float32) * 2.0 - 0.3, 0.0)

    params = init_params(C, kp, dtype=jnp.bfloat16)

    out = fusion_inner(prj_feats, prj_src_feats, prj_depths, params)
    out = jax.block_until_ready(out)

    ref = _reference(prj_feats, prj_src_feats, prj_depths, params)
    assert out.shape == (B, C, H, W)
    assert jnp.allclose(out.astype(jnp.float32), ref.astype(jnp.float32),
                        atol=2e-2, rtol=2e-2), "mismatch vs reference"

    print("KERNEL_OK")
</pallas_src>

<mosaic_0001>
module attributes {stable_mosaic.version = 11 : i64} {
  func.func @_fusion_kernel(%arg0: i32, %arg1: i32, %arg2: memref<1x3x32x256xbf16, #tpu.memory_space<vmem>>, %arg3: memref<1x3x32x256xbf16, #tpu.memory_space<vmem>>, %arg4: memref<1x3x256xf32, #tpu.memory_space<vmem>>, %arg5: memref<32x32xbf16, #tpu.memory_space<vmem>>, %arg6: memref<32x32xbf16, #tpu.memory_space<vmem>>, %arg7: memref<32x1xf32, #tpu.memory_space<vmem>>, %arg8: memref<32x32xbf16, #tpu.memory_space<vmem>>, %arg9: memref<32x1xf32, #tpu.memory_space<vmem>>, %arg10: memref<1x32x256xbf16, #tpu.memory_space<vmem>>) attributes {dimension_semantics = [#tpu.dimension_semantics<parallel>, #tpu.dimension_semantics<parallel>], iteration_bounds = array<i64: 2, 1>, scalar_prefetch = 0 : i64, scratch_operands = 0 : i64, tpu.core_type = #tpu.core_type<tc>, window_params = [{transform_indices = @transform_0, window_bounds = array<i64: 1, 3, 32, 256>}, {transform_indices = @transform_1, window_bounds = array<i64: 1, 3, 32, 256>}, {transform_indices = @transform_2, window_bounds = array<i64: 1, 3, 256>}, {pipeline_mode = #tpu.pipeline_mode<synchronous>, transform_indices = @transform_3, window_bounds = array<i64: 32, 32>}, {pipeline_mode = #tpu.pipeline_mode<synchronous>, transform_indices = @transform_4, window_bounds = array<i64: 32, 32>}, {pipeline_mode = #tpu.pipeline_mode<synchronous>, transform_indices = @transform_5, window_bounds = array<i64: 32, 1>}, {pipeline_mode = #tpu.pipeline_mode<synchronous>, transform_indices = @transform_6, window_bounds = array<i64: 32, 32>}, {pipeline_mode = #tpu.pipeline_mode<synchronous>, transform_indices = @transform_7, window_bounds = array<i64: 32, 1>}, {transform_indices = @transform_8, window_bounds = array<i64: 1, 32, 256>}]} {
    %c0 = arith.constant 0 : index
    %c0_0 = arith.constant 0 : index
    %c0_1 = arith.constant 0 : index
    %0 = vector.load %arg4[%c0, %c0_0, %c0_1] : memref<1x3x256xf32, #tpu.memory_space<vmem>>, vector<1x3x256xf32>
    %1 = vector.shape_cast %0 : vector<1x3x256xf32> to vector<3x256xf32>
    %cst = arith.constant 0.000000e+00 : f32
    %2 = vector.broadcast %cst : f32 to vector<3x256xf32>
    %3 = arith.cmpf ogt, %1, %2 : vector<3x256xf32>
    %cst_2 = arith.constant 0.000000e+00 : f32
    %4 = vector.broadcast %cst_2 : f32 to vector<3x256xf32>
    %5 = arith.subf %4, %1 : vector<3x256xf32>
    %6 = math.exp %5 : vector<3x256xf32>
    %cst_3 = arith.constant 0.000000e+00 : f32
    %7 = vector.broadcast %cst_3 : f32 to vector<3x256xf32>
    %8 = arith.select %3, %6, %7 : vector<3x256xi1>, vector<3x256xf32>
    %cst_4 = arith.constant dense<0.000000e+00> : vector<256xf32>
    %9 = vector.multi_reduction <add>, %8, %cst_4 [0] : vector<3x256xf32> to vector<256xf32>
    %10 = vector.shape_cast %9 : vector<256xf32> to vector<1x256xf32>
    %cst_5 = arith.constant 9.99999997E-7 : f32
    %11 = vector.broadcast %cst_5 : f32 to vector<1x256xf32>
    %12 = arith.addf %10, %11 : vector<1x256xf32>
    %13 = tpu.reciprocal %12 {approx = true} : vector<1x256xf32> -> vector<1x256xf32>
    %c0_6 = arith.constant 0 : index
    %c0_7 = arith.constant 0 : index
    %14 = vector.load %arg5[%c0_6, %c0_7] : memref<32x32xbf16, #tpu.memory_space<vmem>>, vector<32x32xbf16>
    %c0_8 = arith.constant 0 : index
    %c0_9 = arith.constant 0 : index
    %c0_10 = arith.constant 0 : index
    %c0_11 = arith.constant 0 : index
    %15 = vector.load %arg2[%c0_8, %c0_9, %c0_10, %c0_11] : memref<1x3x32x256xbf16, #tpu.memory_space<vmem>>, vector<1x1x32x256xbf16>
    %16 = vector.shape_cast %15 : vector<1x1x32x256xbf16> to vector<32x256xbf16>
    %cst_12 = arith.constant dense<0.000000e+00> : vector<32x256xf32>
    %17 = tpu.matmul %14, %16, %cst_12 {dimension_numbers = #tpu.dot_dimension_numbers<[1], [0], [0], [1], [0, 0, 1, 1], [], []>} : vector<32x32xbf16>, vector<32x256xbf16>, vector<32x256xf32> -> vector<32x256xf32>
    %c0_13 = arith.constant 0 : index
    %c0_14 = arith.constant 0 : index
    %18 = vector.load %arg6[%c0_13, %c0_14] : memref<32x32xbf16, #tpu.memory_space<vmem>>, vector<32x32xbf16>
    %c0_15 = arith.constant 0 : index
    %c0_16 = arith.constant 0 : index
    %c0_17 = arith.constant 0 : index
    %c0_18 = arith.constant 0 : index
    %19 = vector.load %arg3[%c0_15, %c0_16, %c0_17, %c0_18] : memref<1x3x32x256xbf16, #tpu.memory_space<vmem>>, vector<1x1x32x256xbf16>
    %20 = vector.shape_cast %19 : vector<1x1x32x256xbf16> to vector<32x256xbf16>
    %cst_19 = arith.constant dense<0.000000e+00> : vector<32x256xf32>
    %21 = tpu.matmul %18, %20, %cst_19 {dimension_numbers = #tpu.dot_dimension_numbers<[1], [0], [0], [1], [0, 0, 1, 1], [], []>} : vector<32x32xbf16>, vector<32x256xbf16>, vector<32x256xf32> -> vector<32x256xf32>
    %22 = arith.addf %17, %21 : vector<32x256xf32>
    %c0_20 = arith.constant 0 : index
    %c0_21 = arith.constant 0 : index
    %23 = vector.load %arg7[%c0_20, %c0_21] : memref<32x1xf32, #tpu.memory_space<vmem>>, vector<32x1xf32>
    %24 = vector.broadcast %23 : vector<32x1xf32> to vector<32x256xf32>
    %25 = arith.addf %22, %24 : vector<32x256xf32>
    %cst_22 = arith.constant 0.000000e+00 : f32
    %26 = vector.broadcast %cst_22 : f32 to vector<32x256xf32>
    %27 = arith.maximumf %25, %26 : vector<32x256xf32>
    %28 = vector.extract_strided_slice %8 {offsets = [0, 0], sizes = [1, 256], strides = [1, 1]} : vector<3x256xf32> to vector<1x256xf32>
    %29 = vector.broadcast %28 : vector<1x256xf32> to vector<32x256xf32>
    %30 = arith.mulf %29, %27 : vector<32x256xf32>
    %c0_23 = arith.constant 0 : index
    %c0_24 = arith.constant 0 : index
    %31 = vector.load %arg5[%c0_23, %c0_24] : memref<32x32xbf16, #tpu.memory_space<vmem>>, vector<32x32xbf16>
    %c0_25 = arith.constant 0 : index
    %c1 = arith.constant 1 : index
    %c0_26 = arith.constant 0 : index
    %c0_27 = arith.constant 0 : index
    %32 = vector.load %arg2[%c0_25, %c1, %c0_26, %c0_27] : memref<1x3x32x256xbf16, #tpu.memory_space<vmem>>, vector<1x1x32x256xbf16>
    %33 = vector.shape_cast %32 : vector<1x1x32x256xbf16> to vector<32x256xbf16>
    %cst_28 = arith.constant dense<0.000000e+00> : vector<32x256xf32>
    %34 = tpu.matmul %31, %33, %cst_28 {dimension_numbers = #tpu.dot_dimension_numbers<[1], [0], [0], [1], [0, 0, 1, 1], [], []>} : vector<32x32xbf16>, vector<32x256xbf16>, vector<32x256xf32> -> vector<32x256xf32>
    %c0_29 = arith.constant 0 : index
    %c0_30 = arith.constant 0 : index
    %35 = vector.load %arg6[%c0_29, %c0_30] : memref<32x32xbf16, #tpu.memory_space<vmem>>, vector<32x32xbf16>
    %c0_31 = arith.constant 0 : index
    %c1_32 = arith.constant 1 : index
    %c0_33 = arith.constant 0 : index
    %c0_34 = arith.constant 0 : index
    %36 = vector.load %arg3[%c0_31, %c1_32, %c0_33, %c0_34] : memref<1x3x32x256xbf16, #tpu.memory_space<vmem>>, vector<1x1x32x256xbf16>
    %37 = vector.shape_cast %36 : vector<1x1x32x256xbf16> to vector<32x256xbf16>
    %cst_35 = arith.constant dense<0.000000e+00> : vector<32x256xf32>
    %38 = tpu.matmul %35, %37, %cst_35 {dimension_numbers = #tpu.dot_dimension_numbers<[1], [0], [0], [1], [0, 0, 1, 1], [], []>} : vector<32x32xbf16>, vector<32x256xbf16>, vector<32x256xf32> -> vector<32x256xf32>
    %39 = arith.addf %34, %38 : vector<32x256xf32>
    %c0_36 = arith.constant 0 : index
    %c0_37 = arith.constant 0 : index
    %40 = vector.load %arg7[%c0_36, %c0_37] : memref<32x1xf32, #tpu.memory_space<vmem>>, vector<32x1xf32>
    %41 = vector.broadcast %40 : vector<32x1xf32> to vector<32x256xf32>
    %42 = arith.addf %39, %41 : vector<32x256xf32>
    %cst_38 = arith.constant 0.000000e+00 : f32
    %43 = vector.broadcast %cst_38 : f32 to vector<32x256xf32>
    %44 = arith.maximumf %42, %43 : vector<32x256xf32>
    %45 = vector.extract_strided_slice %8 {offsets = [1, 0], sizes = [1, 256], strides = [1, 1]} : vector<3x256xf32> to vector<1x256xf32>
    %46 = vector.broadcast %45 : vector<1x256xf32> to vector<32x256xf32>
    %47 = arith.mulf %46, %44 : vector<32x256xf32>
    %48 = arith.addf %30, %47 : vector<32x256xf32>
    %c0_39 = arith.constant 0 : index
    %c0_40 = arith.constant 0 : index
    %49 = vector.load %arg5[%c0_39, %c0_40] : memref<32x32xbf16, #tpu.memory_space<vmem>>, vector<32x32xbf16>
    %c0_41 = arith.constant 0 : index
    %c2 = arith.constant 2 : index
    %c0_42 = arith.constant 0 : index
    %c0_43 = arith.constant 0 : index
    %50 = vector.load %arg2[%c0_41, %c2, %c0_42, %c0_43] : memref<1x3x32x256xbf16, #tpu.memory_space<vmem>>, vector<1x1x32x256xbf16>
    %51 = vector.shape_cast %50 : vector<1x1x32x256xbf16> to vector<32x256xbf16>
    %cst_44 = arith.constant dense<0.000000e+00> : vector<32x256xf32>
    %52 = tpu.matmul %49, %51, %cst_44 {dimension_numbers = #tpu.dot_dimension_numbers<[1], [0], [0], [1], [0, 0, 1, 1], [], []>} : vector<32x32xbf16>, vector<32x256xbf16>, vector<32x256xf32> -> vector<32x256xf32>
    %c0_45 = arith.constant 0 : index
    %c0_46 = arith.constant 0 : index
    %53 = vector.load %arg6[%c0_45, %c0_46] : memref<32x32xbf16, #tpu.memory_space<vmem>>, vector<32x32xbf16>
    %c0_47 = arith.constant 0 : index
    %c2_48 = arith.constant 2 : index
    %c0_49 = arith.constant 0 : index
    %c0_50 = arith.constant 0 : index
    %54 = vector.load %arg3[%c0_47, %c2_48, %c0_49, %c0_50] : memref<1x3x32x256xbf16, #tpu.memory_space<vmem>>, vector<1x1x32x256xbf16>
    %55 = vector.shape_cast %54 : vector<1x1x32x256xbf16> to vector<32x256xbf16>
    %cst_51 = arith.constant dense<0.000000e+00> : vector<32x256xf32>
    %56 = tpu.matmul %53, %55, %cst_51 {dimension_numbers = #tpu.dot_dimension_numbers<[1], [0], [0], [1], [0, 0, 1, 1], [], []>} : vector<32x32xbf16>, vector<32x256xbf16>, vector<32x256xf32> -> vector<32x256xf32>
    %57 = arith.addf %52, %56 : vector<32x256xf32>
    %c0_52 = arith.constant 0 : index
    %c0_53 = arith.constant 0 : index
    %58 = vector.load %arg7[%c0_52, %c0_53] : memref<32x1xf32, #tpu.memory_space<vmem>>, vector<32x1xf32>
    %59 = vector.broadcast %58 : vector<32x1xf32> to vector<32x256xf32>
    %60 = arith.addf %57, %59 : vector<32x256xf32>
    %cst_54 = arith.constant 0.000000e+00 : f32
    %61 = vector.broadcast %cst_54 : f32 to vector<32x256xf32>
    %62 = arith.maximumf %60, %61 : vector<32x256xf32>
    %63 = vector.extract_strided_slice %8 {offsets = [2, 0], sizes = [1, 256], strides = [1, 1]} : vector<3x256xf32> to vector<1x256xf32>
    %64 = vector.broadcast %63 : vector<1x256xf32> to vector<32x256xf32>
    %65 = arith.mulf %64, %62 : vector<32x256xf32>
    %66 = arith.addf %48, %65 : vector<32x256xf32>
    %c0_55 = arith.constant 0 : index
    %c0_56 = arith.constant 0 : index
    %67 = vector.load %arg8[%c0_55, %c0_56] : memref<32x32xbf16, #tpu.memory_space<vmem>>, vector<32x32xbf16>
    %68 = arith.truncf %66 : vector<32x256xf32> to vector<32x256xbf16>
    %cst_57 = arith.constant dense<0.000000e+00> : vector<32x256xf32>
    %69 = tpu.matmul %67, %68, %cst_57 {dimension_numbers = #tpu.dot_dimension_numbers<[1], [0], [0], [1], [0, 0, 1, 1], [], []>} : vector<32x32xbf16>, vector<32x256xbf16>, vector<32x256xf32> -> vector<32x256xf32>
    %70 = vector.broadcast %13 : vector<1x256xf32> to vector<32x256xf32>
    %71 = arith.mulf %69, %70 : vector<32x256xf32>
    %c0_58 = arith.constant 0 : index
    %c0_59 = arith.constant 0 : index
    %72 = vector.load %arg9[%c0_58, %c0_59] : memref<32x1xf32, #tpu.memory_space<vmem>>, vector<32x1xf32>
    %73 = vector.broadcast %72 : vector<32x1xf32> to vector<32x256xf32>
    %74 = arith.addf %71, %73 : vector<32x256xf32>
    %75 = arith.truncf %74 : vector<32x256xf32> to vector<32x256xbf16>
    %c0_60 = arith.constant 0 : index
    %c0_61 = arith.constant 0 : index
    %c0_62 = arith.constant 0 : index
    %76 = vector.load %arg10[%c0_60, %c0_61, %c0_62] : memref<1x32x256xbf16, #tpu.memory_space<vmem>>, vector<1x32x256xbf16>
    %77 = vector.shape_cast %76 : vector<1x32x256xbf16> to vector<32x256xbf16>
    %78 = vector.shape_cast %75 : vector<32x256xbf16> to vector<1x32x256xbf16>
    tpu.vector_store %arg10[%c0_60, %c0_61, %c0_62], %78 {strides = array<i32>} : memref<1x32x256xbf16, #tpu.memory_space<vmem>>, vector<1x32x256xbf16>,
    return
  }
  func.func @transform_0(%arg0: i32, %arg1: i32) -> (i32, i32, i32, i32) {
    %c0_i32 = arith.constant 0 : i32
    %c0_i32_0 = arith.constant 0 : i32
    %c0_i32_1 = arith.constant 0 : i32
    return %arg0, %c0_i32, %c0_i32_0, %arg1 : i32, i32, i32, i32
  }
  func.func @transform_1(%arg0: i32, %arg1: i32) -> (i32, i32, i32, i32) {
    %c0_i32 = arith.constant 0 : i32
    %c0_i32_0 = arith.constant 0 : i32
    %c0_i32_1 = arith.constant 0 : i32
    return %arg0, %c0_i32, %c0_i32_0, %arg1 : i32, i32, i32, i32
  }
  func.func @transform_2(%arg0: i32, %arg1: i32) -> (i32, i32, i32) {
    %c0_i32 = arith.constant 0 : i32
    %c0_i32_0 = arith.constant 0 : i32
    return %arg0, %c0_i32, %arg1 : i32, i32, i32
  }
  func.func @transform_3(%arg0: i32, %arg1: i32) -> (i32, i32) {
    %c0_i32 = arith.constant 0 : i32
    %c0_i32_0 = arith.constant 0 : i32
    %c0_i32_1 = arith.constant 0 : i32
    return %c0_i32, %c0_i32_0 : i32, i32
  }
  func.func @transform_4(%arg0: i32, %arg1: i32) -> (i32, i32) {
    %c0_i32 = arith.constant 0 : i32
    %c0_i32_0 = arith.constant 0 : i32
    %c0_i32_1 = arith.constant 0 : i32
    return %c0_i32, %c0_i32_0 : i32, i32
  }
  func.func @transform_5(%arg0: i32, %arg1: i32) -> (i32, i32) {
    %c0_i32 = arith.constant 0 : i32
    %c0_i32_0 = arith.constant 0 : i32
    %c0_i32_1 = arith.constant 0 : i32
    return %c0_i32, %c0_i32_0 : i32, i32
  }
  func.func @transform_6(%arg0: i32, %arg1: i32) -> (i32, i32) {
    %c0_i32 = arith.constant 0 : i32
    %c0_i32_0 = arith.constant 0 : i32
    %c0_i32_1 = arith.constant 0 : i32
    return %c0_i32, %c0_i32_0 : i32, i32
  }
  func.func @transform_7(%arg0: i32, %arg1: i32) -> (i32, i32) {
    %c0_i32 = arith.constant 0 : i32
    %c0_i32_0 = arith.constant 0 : i32
    %c0_i32_1 = arith.constant 0 : i32
    return %c0_i32, %c0_i32_0 : i32, i32
  }
  func.func @transform_8(%arg0: i32, %arg1: i32) -> (i32, i32, i32) {
    %c0_i32 = arith.constant 0 : i32
    %c0_i32_0 = arith.constant 0 : i32
    return %arg0, %c0_i32, %arg1 : i32, i32, i32
  }
}

</mosaic_0001>

<llo_original>
// kernel: tpu_custom_call.1
$region0: #{tpu_custom_call.1}
  #allocation0 [shape = 'u32[]', space=smem, size = 0x4, offset = 0x4, fixed_abs, tag = 'smem constant byte address 0x4 - core index']
  #allocation1 [shape = 'u32[144,128]{1,0:T(1,128)}', space=vmem, size = 0x12000, scoped, tag = 'internal scratch']
  %s0 = inlined_call_operand.hbm [shape: bf16[2,3,32,256], index: 0, kind: input, shape index: {}]
  %s1 = inlined_call_operand.hbm [shape: bf16[2,3,32,256], index: 1, kind: input, shape index: {}]
  %s2 = inlined_call_operand.vmem [shape: f32[2,3,256], index: 2, kind: input, shape index: {}]
  %s3 = inlined_call_operand.vmem [shape: bf16[32,32], index: 3, kind: input, shape index: {}]
  %s4 = inlined_call_operand.vmem [shape: bf16[32,32], index: 4, kind: input, shape index: {}]
  %s5 = inlined_call_operand.vmem [shape: f32[32,1], index: 5, kind: input, shape index: {}]
  %s6 = inlined_call_operand.vmem [shape: bf16[32,32], index: 6, kind: input, shape index: {}]
  %s7 = inlined_call_operand.vmem [shape: f32[32,1], index: 7, kind: input, shape index: {}]
  %s8 = inlined_call_operand.hbm [shape: bf16[2,32,256], index: 8, kind: output, shape index: {}]
  %s9 = sld [smem:[#allocation0]]
  $region73: #{tpu_custom_call.1} parent=0
    _
  %s11 = ssub.s32 1, %s9
  %s12 = scalar_select 0, %s11, %s9
  $region1: #{tpu_custom_call.1} parent=0
    #allocation2 [shape = 'u8[98304]{0}', space=vmem, size = 0x18000, scoped, tag = 'input window, operand 0']
    #allocation3 [shape = 's32[2]{0}', space=sflag, size = 0x8, scoped, tag = 'scoped memory for tpu_custom_call.1']
    #allocation4 [shape = 's32[2]{0}', space=sflag, size = 0x8, scoped, tag = 'scoped memory for tpu_custom_call.1']
    #allocation5 [shape = 'u8[98304]{0}', space=vmem, size = 0x18000, scoped, tag = 'input window, operand 1']
    #allocation6 [shape = 's32[2]{0}', space=sflag, size = 0x8, scoped, tag = 'scoped memory for tpu_custom_call.1']
    #allocation7 [shape = 'u8[32768]{0}', space=vmem, size = 0x8000, scoped, tag = 'output window, operand 0']
    %13 = vsyncpa [#allocation3], 0
    %s14 = scalar_lea.sflag [#allocation3], 1
    %15 = vsyncpa %s14, 0
    %16 = vsyncpa [#allocation6], 0
    %s17 = scalar_lea.sflag [#allocation6], 1
    %18 = vsyncpa %s17, 0
    %19 = vsyncpa [#allocation4], 0
    %s20 = scalar_lea.sflag [#allocation4], 1
    %21 = vsyncpa %s20, 0
    loop: start=0, step=1, limit=4
    $region2: #{tpu_custom_call.1} parent=1 // loop_pre_header
      _
    $region3: #{tpu_custom_call.1} parent=1 // loop_header
      %s23 = sphi 0, %s27
      %p24 = scmp.ge.s32.totalorder %s23, 4
      %s30 = sphi 0, %s42
      %s31 = sphi 0, %s38
      %s32 = sphi 0, %s30
      %s33 = sphi 0, %s31
      %s34 = sphi 0, %s32
      %s35 = sphi 0, %s33
      %s47 = sphi 0, %s49
      %s50 = sphi 0, %s47
      %s51 = sphi 0, %s50
      %s67 = sphi 0, %s51
      %s75 = sphi 0, %s77
      %s78 = sphi 0, %s75
      %s79 = sphi 0, %s78
      %s95 = sphi 0, %s79
      %s103 = sphi 0, %s105
      %s106 = sphi 0, %s103
      %s107 = sphi 0, %s106
      %s123 = sphi 0, %s107
      %s127 = sphi 0, %s127
      %s129 = sphi 0, %s127
      %s130 = sphi 0, %s129
      %s144 = sphi 0, %s130
      %s148 = sphi 0, %s148
      %s150 = sphi 0, %s148
      %s151 = sphi 0, %s150
      %s165 = sphi 0, %s151
      %s169 = sphi 0, %s169
      %s171 = sphi 0, %s169
      %s172 = sphi 0, %s171
      %s186 = sphi 0, %s172
      %s190 = sphi 0, %s190
      %s192 = sphi 0, %s190
      %s193 = sphi 0, %s192
      %s207 = sphi 0, %s193
      %s211 = sphi 0, %s211
      %s213 = sphi 0, %s211
      %s214 = sphi 0, %s213
      %s228 = sphi 0, %s214
      %s236 = sphi 0, %s238
      %s239 = sphi 0, %s236
      %s240 = sphi 0, %s239
      %s256 = sphi 0, %s240
    $region4: #{tpu_custom_call.1} parent=1 // loop_header_branch
      %26 = sbr.rel (%p24) target = $region8
    $region5: #{tpu_custom_call.1} parent=1 // loop_body
      %s28 = ssub.s32 %s23, 1
      %s29 = ssub.s32 %s23, 2
      %s36 = sadd.s32 1, %s31
      %p37 = scmp.ge.s32.totalorder %s36, 1
      %s38 = scalar_select %p37, 0, %s36
      %s39 = sadd.s32 1, %s30
      %s40 = scalar_select %p37, %s39, %s30
      %p41 = scmp.ge.s32.totalorder %s40, 2
      %s42 = scalar_select %p41, 0, %s40
      %s43 = ssub.s32 %s30, %s42
      %s44 = ssub.s32 %s31, %s38
      %s45 = sor.u32 %s43, %s44
      %p46 = scmp.eq.s32.totalorder %s45, 0
      %s48 = sadd.s32 %s47, 1
      %s49 = scalar_select %p46, %s47, %s48
      %p52 = pneg %p46
      %p53 = scmp.eq.s32.totalorder %s23, 1
      %p54 = por %p52, %p53
      %p55 = scmp.ne.s32.totalorder %s47, %s50
      %p56 = scmp.eq.s32.totalorder %s23, 0
      %p57 = por %p55, %p56
      %p58 = scmp.ne.s32.totalorder %s47, %s50
      %p59 = scmp.eq.s32.totalorder %s28, 1
      %p60 = por %p58, %p59
      %p61 = scmp.ne.s32.totalorder %s50, %s51
      %p62 = scmp.eq.s32.totalorder %s28, 0
      %p63 = por %p61, %p62
      %p64 = scmp.ne.s32.totalorder %s50, %s51
      %p65 = scmp.eq.s32.totalorder %s29, 1
      %p66 = por %p64, %p65
      %p68 = scmp.ne.s32.totalorder %s51, %s67
      %p69 = scmp.eq.s32.totalorder %s29, 0
      %p70 = por %p68, %p69
      %s71 = ssub.s32 %s30, %s42
      %s72 = ssub.s32 %s31, %s38
      %s73 = sor.u32 %s71, %s72
      %p74 = scmp.eq.s32.totalorder %s73, 0
      %s76 = sadd.s32 %s75, 1
      %s77 = scalar_select %p74, %s75, %s76
      %p80 = pneg %p74
      %p81 = scmp.eq.s32.totalorder %s23, 1
      %p82 = por %p80, %p81
      %p83 = scmp.ne.s32.totalorder %s75, %s78
      %p84 = scmp.eq.s32.totalorder %s23, 0
      %p85 = por %p83, %p84
      %p86 = scmp.ne.s32.totalorder %s75, %s78
      %p87 = scmp.eq.s32.totalorder %s28, 1
      %p88 = por %p86, %p87
      %p89 = scmp.ne.s32.totalorder %s78, %s79
      %p90 = scmp.eq.s32.totalorder %s28, 0
      %p91 = por %p89, %p90
      %p92 = scmp.ne.s32.totalorder %s78, %s79
      %p93 = scmp.eq.s32.totalorder %s29, 1
      %p94 = por %p92, %p93
      %p96 = scmp.ne.s32.totalorder %s79, %s95
      %p97 = scmp.eq.s32.totalorder %s29, 0
      %p98 = por %p96, %p97
      %s99 = ssub.s32 %s30, %s42
      %s100 = ssub.s32 %s31, %s38
      %s101 = sor.u32 %s99, %s100
      %p102 = scmp.eq.s32.totalorder %s101, 0
      %s104 = sadd.s32 %s103, 1
      %s105 = scalar_select %p102, %s103, %s104
      %p108 = pneg %p102
      %p109 = scmp.eq.s32.totalorder %s23, 1
      %p110 = por %p108, %p109
      %p111 = scmp.ne.s32.totalorder %s103, %s106
      %p112 = scmp.eq.s32.totalorder %s23, 0
      %p113 = por %p111, %p112
      %p114 = scmp.ne.s32.totalorder %s103, %s106
      %p115 = scmp.eq.s32.totalorder %s28, 1
      %p116 = por %p114, %p115
      %p117 = scmp.ne.s32.totalorder %s106, %s107
      %p118 = scmp.eq.s32.totalorder %s28, 0
      %p119 = por %p117, %p118
      %p120 = scmp.ne.s32.totalorder %s106, %s107
      %p121 = scmp.eq.s32.totalorder %s29, 1
      %p122 = por %p120, %p121
      %p124 = scmp.ne.s32.totalorder %s107, %s123
      %p125 = scmp.eq.s32.totalorder %s29, 0
      %p126 = por %p124, %p125
      %s128 = sadd.s32 %s127, 1
      %p131 = scmp.eq.s32.totalorder %s23, 1
      %p132 = scmp.ne.s32.totalorder %s127, %s129
      %p133 = scmp.eq.s32.totalorder %s23, 0
      %p134 = por %p132, %p133
      %p135 = scmp.ne.s32.totalorder %s127, %s129
      %p136 = scmp.eq.s32.totalorder %s28, 1
      %p137 = por %p135, %p136
      %p138 = scmp.ne.s32.totalorder %s129, %s130
      %p139 = scmp.eq.s32.totalorder %s28, 0
      %p140 = por %p138, %p139
      %p141 = scmp.ne.s32.totalorder %s129, %s130
      %p142 = scmp.eq.s32.totalorder %s29, 1
      %p143 = por %p141, %p142
      %p145 = scmp.ne.s32.totalorder %s130, %s144
      %p146 = scmp.eq.s32.totalorder %s29, 0
      %p147 = por %p145, %p146
      %s149 = sadd.s32 %s148, 1
      %p152 = scmp.eq.s32.totalorder %s23, 1
      %p153 = scmp.ne.s32.totalorder %s148, %s150
      %p154 = scmp.eq.s32.totalorder %s23, 0
      %p155 = por %p153, %p154
      %p156 = scmp.ne.s32.totalorder %s148, %s150
      %p157 = scmp.eq.s32.totalorder %s28, 1
      %p158 = por %p156, %p157
      %p159 = scmp.ne.s32.totalorder %s150, %s151
      %p160 = scmp.eq.s32.totalorder %s28, 0
      %p161 = por %p159, %p160
      %p162 = scmp.ne.s32.totalorder %s150, %s151
      %p163 = scmp.eq.s32.totalorder %s29, 1
      %p164 = por %p162, %p163
      %p166 = scmp.ne.s32.totalorder %s151, %s165
      %p167 = scmp.eq.s32.totalorder %s29, 0
      %p168 = por %p166, %p167
      %s170 = sadd.s32 %s169, 1
      %p173 = scmp.eq.s32.totalorder %s23, 1
      %p174 = scmp.ne.s32.totalorder %s169, %s171
      %p175 = scmp.eq.s32.totalorder %s23, 0
      %p176 = por %p174, %p175
      %p177 = scmp.ne.s32.totalorder %s169, %s171
      %p178 = scmp.eq.s32.totalorder %s28, 1
      %p179 = por %p177, %p178
      %p180 = scmp.ne.s32.totalorder %s171, %s172
      %p181 = scmp.eq.s32.totalorder %s28, 0
      %p182 = por %p180, %p181
      %p183 = scmp.ne.s32.totalorder %s171, %s172
      %p184 = scmp.eq.s32.totalorder %s29, 1
      %p185 = por %p183, %p184
      %p187 = scmp.ne.s32.totalorder %s172, %s186
      %p188 = scmp.eq.s32.totalorder %s29, 0
      %p189 = por %p187, %p188
      %s191 = sadd.s32 %s190, 1
      %p194 = scmp.eq.s32.totalorder %s23, 1
      %p195 = scmp.ne.s32.totalorder %s190, %s192
      %p196 = scmp.eq.s32.totalorder %s23, 0
      %p197 = por %p195, %p196
      %p198 = scmp.ne.s32.totalorder %s190, %s192
      %p199 = scmp.eq.s32.totalorder %s28, 1
      %p200 = por %p198, %p199
      %p201 = scmp.ne.s32.totalorder %s192, %s193
      %p202 = scmp.eq.s32.totalorder %s28, 0
      %p203 = por %p201, %p202
      %p204 = scmp.ne.s32.totalorder %s192, %s193
      %p205 = scmp.eq.s32.totalorder %s29, 1
      %p206 = por %p204, %p205
      %p208 = scmp.ne.s32.totalorder %s193, %s207
      %p209 = scmp.eq.s32.totalorder %s29, 0
      %p210 = por %p208, %p209
      %s212 = sadd.s32 %s211, 1
      %p215 = scmp.eq.s32.totalorder %s23, 1
      %p216 = scmp.ne.s32.totalorder %s211, %s213
      %p217 = scmp.eq.s32.totalorder %s23, 0
      %p218 = por %p216, %p217
      %p219 = scmp.ne.s32.totalorder %s211, %s213
      %p220 = scmp.eq.s32.totalorder %s28, 1
      %p221 = por %p219, %p220
      %p222 = scmp.ne.s32.totalorder %s213, %s214
      %p223 = scmp.eq.s32.totalorder %s28, 0
      %p224 = por %p222, %p223
      %p225 = scmp.ne.s32.totalorder %s213, %s214
      %p226 = scmp.eq.s32.totalorder %s29, 1
      %p227 = por %p225, %p226
      %p229 = scmp.ne.s32.totalorder %s214, %s228
      %p230 = scmp.eq.s32.totalorder %s29, 0
      %p231 = por %p229, %p230
      %s232 = ssub.s32 %s30, %s42
      %s233 = ssub.s32 %s31, %s38
      %s234 = sor.u32 %s232, %s233
      %p235 = scmp.eq.s32.totalorder %s234, 0
      %s237 = sadd.s32 %s236, 1
      %s238 = scalar_select %p235, %s236, %s237
      %p241 = pneg %p235
      %p242 = scmp.eq.s32.totalorder %s23, 1
      %p243 = por %p241, %p242
      %p244 = scmp.ne.s32.totalorder %s236, %s239
      %p245 = scmp.eq.s32.totalorder %s23, 0
      %p246 = por %p244, %p245
      %p247 = scmp.ne.s32.totalorder %s236, %s239
      %p248 = scmp.eq.s32.totalorder %s28, 1
      %p249 = por %p247, %p248
      %p250 = scmp.ne.s32.totalorder %s239, %s240
      %p251 = scmp.eq.s32.totalorder %s28, 0
      %p252 = por %p250, %p251
      %p253 = scmp.ne.s32.totalorder %s239, %s240
      %p254 = scmp.eq.s32.totalorder %s29, 1
      %p255 = por %p253, %p254
      %p257 = scmp.ne.s32.totalorder %s240, %s256
      %p258 = scmp.eq.s32.totalorder %s29, 0
      %p259 = por %p257, %p258
      %p260 = scmp.le.s32.totalorder 1, %s23
      %p261 = scmp.lt.s32.totalorder %s23, 3
      %p262 = pnand %p260, %p261
      %p263 = pneg %p262
      // Predicated region
      $region9: #{tpu_custom_call.1} parent=5 // pred_check
        _
      $region10: #{tpu_custom_call.1} parent=5 // pred_check_branch
        %265 = sbr.rel (%p262) target = $region12
      $region11: #{tpu_custom_call.1} parent=5 // pred_region
        %s266 = ssub.s32 %s23, 1
        // Predicated region
        $region13: #{tpu_custom_call.1} parent=11 // pred_check
          %p267 = pneg %p140
        $region14: #{tpu_custom_call.1} parent=11 // pred_check_branch
          %269 = sbr.rel (%p267) target = $region16
        $region15: #{tpu_custom_call.1} parent=11 // pred_region
          _
        $region16: #{tpu_custom_call.1} parent=11 // pred_fallthru
          _
        // Predicated region
        $region17: #{tpu_custom_call.1} parent=11 // pred_check
          %p270 = pneg %p161
        $region18: #{tpu_custom_call.1} parent=11 // pred_check_branch
          %272 = sbr.rel (%p270) target = $region20
        $region19: #{tpu_custom_call.1} parent=11 // pred_region
          _
        $region20: #{tpu_custom_call.1} parent=11 // pred_fallthru
          _
        // Predicated region
        $region21: #{tpu_custom_call.1} parent=11 // pred_check
          %p273 = pneg %p182
        $region22: #{tpu_custom_call.1} parent=11 // pred_check_branch
          %275 = sbr.rel (%p273) target = $region24
        $region23: #{tpu_custom_call.1} parent=11 // pred_region
          _
        $region24: #{tpu_custom_call.1} parent=11 // pred_fallthru
          _
        // Predicated region
        $region25: #{tpu_custom_call.1} parent=11 // pred_check
          %p276 = pneg %p203
        $region26: #{tpu_custom_call.1} parent=11 // pred_check_branch
          %278 = sbr.rel (%p276) target = $region28
        $region27: #{tpu_custom_call.1} parent=11 // pred_region
          _
        $region28: #{tpu_custom_call.1} parent=11 // pred_fallthru
          _
        // Predicated region
        $region29: #{tpu_custom_call.1} parent=11 // pred_check
          %p279 = pneg %p224
        $region30: #{tpu_custom_call.1} parent=11 // pred_check_branch
          %281 = sbr.rel (%p279) target = $region32
        $region31: #{tpu_custom_call.1} parent=11 // pred_region
          _
        $region32: #{tpu_custom_call.1} parent=11 // pred_fallthru
          _
      $region12: #{tpu_custom_call.1} parent=5 // pred_fallthru
        _
      %p282 = scmp.lt.s32.totalorder %s23, 2
      // Predicated region
      $region33: #{tpu_custom_call.1} parent=5 // pred_check
        %p283 = pneg %p282
      $region34: #{tpu_custom_call.1} parent=5 // pred_check_branch
        %285 = sbr.rel (%p283) target = $region36
      $region35: #{tpu_custom_call.1} parent=5 // pred_region
        // Predicated region
        $region37: #{tpu_custom_call.1} parent=35 // pred_check
          %p286 = pneg %p57
        $region38: #{tpu_custom_call.1} parent=35 // pred_check_branch
          %288 = sbr.rel (%p286) target = $region40
        $region39: #{tpu_custom_call.1} parent=35 // pred_region
          %s289 = sand.u32 %s47, 1
          %s290 = scalar_lea.sflag [#allocation3], %s289
          %s291 = sand.u32 %s47, 1
          %s292 = smul.addr %s291, 96
          %s293 = scalar_lea.vmem [#allocation2], %s292
          %s294 = smul.u32 2, %s31
          %s296 = ssub.s32 1536, 1536
          %297 = vsyncadd %s290, %s296
          %s298 = smul.addr %s30, 24
          %s299 = sadd.s32 %s294, %s298
          %s300 = smul.addr %s299, 64
          %s301 = scalar_lea.hbm %s0, %s300
          %s302 = sshll.u32 %s293, 4
          %s303 = int_to_ptr.vmem [resolvable:$true] %s302
          %308 = dma.hbm_to_vmem [thread:$0]  %s301, 1536, %s303, %s290, 128, 128, 8
        $region40: #{tpu_custom_call.1} parent=35 // pred_fallthru
          _
        // Predicated region
        $region41: #{tpu_custom_call.1} parent=35 // pred_check
          %p309 = pneg %p85
        $region42: #{tpu_custom_call.1} parent=35 // pred_check_branch
          %311 = sbr.rel (%p309) target = $region44
        $region43: #{tpu_custom_call.1} parent=35 // pred_region
          %s312 = sand.u32 %s75, 1
          %s313 = scalar_lea.sflag [#allocation6], %s312
          %s314 = sand.u32 %s75, 1
          %s315 = smul.addr %s314, 96
          %s316 = scalar_lea.vmem [#allocation5], %s315
          %s317 = smul.u32 2, %s31
          %s319 = ssub.s32 1536, 1536
          %320 = vsyncadd %s313, %s319
          %s321 = smul.addr %s30, 24
          %s322 = sadd.s32 %s317, %s321
          %s323 = smul.addr %s322, 64
          %s324 = scalar_lea.hbm %s1, %s323
          %s325 = sshll.u32 %s316, 4
          %s326 = int_to_ptr.vmem [resolvable:$true] %s325
          %331 = dma.hbm_to_vmem [thread:$0]  %s324, 1536, %s326, %s313, 128, 128, 8
        $region44: #{tpu_custom_call.1} parent=35 // pred_fallthru
          _
        // Predicated region
        $region45: #{tpu_custom_call.1} parent=35 // pred_check
          %p332 = pneg %p113
        $region46: #{tpu_custom_call.1} parent=35 // pred_check_branch
          %334 = sbr.rel (%p332) target = $region48
        $region47: #{tpu_custom_call.1} parent=35 // pred_region
          %s335 = smul.u32 2, %s31
          %p336 = scmp.lt.s32.totalorder %s30, 1
          %s337 = scalar_select %p336, %s30, 1
          %p338 = scmp.lt.s32.totalorder %s335, 1
          %s339 = scalar_select %p338, %s335, 1
          %s340 = smul.addr %s337, 2
          %s341 = sadd.s32 %s339, %s340
          %s342 = smul.addr %s341, 4
          %s343 = scalar_lea.vmem %s2, %s342
          %s344 = smul.u32 2, %s31
        $region48: #{tpu_custom_call.1} parent=35 // pred_fallthru
          _
      $region36: #{tpu_custom_call.1} parent=5 // pred_fallthru
        _
      %p345 = scmp.le.s32.totalorder 1, %s23
      %p346 = scmp.lt.s32.totalorder %s23, 3
      %p347 = pnand %p345, %p346
      %p348 = pneg %p347
      // Predicated region
      $region49: #{tpu_custom_call.1} parent=5 // pred_check
        _
      $region50: #{tpu_custom_call.1} parent=5 // pred_check_branch
        %350 = sbr.rel (%p347) target = $region52
      $region51: #{tpu_custom_call.1} parent=5 // pred_region
        %s351 = ssub.s32 %s23, 1
        %s352 = sand.u32 %s50, 1
        %s353 = scalar_lea.sflag [#allocation3], %s352
        %s354 = sand.u32 %s50, 1
        %s355 = smul.addr %s354, 96
        %s356 = scalar_lea.vmem [#allocation2], %s355
        // Predicated region
        $region53: #{tpu_custom_call.1} parent=51 // pred_check
          %p357 = pneg %p63
        $region54: #{tpu_custom_call.1} parent=51 // pred_check_branch
          %359 = sbr.rel (%p357) target = $region56
        $region55: #{tpu_custom_call.1} parent=51 // pred_region
          %360 = dma.done %s353, 1536
        $region56: #{tpu_custom_call.1} parent=51 // pred_fallthru
          _
        %s361 = sand.u32 %s78, 1
        %s362 = scalar_lea.sflag [#allocation6], %s361
        %s363 = sand.u32 %s78, 1
        %s364 = smul.addr %s363, 96
        %s365 = scalar_lea.vmem [#allocation5], %s364
        // Predicated region
        $region57: #{tpu_custom_call.1} parent=51 // pred_check
          %p366 = pneg %p91
        $region58: #{tpu_custom_call.1} parent=51 // pred_check_branch
          %368 = sbr.rel (%p366) target = $region60
        $region59: #{tpu_custom_call.1} parent=51 // pred_region
          %369 = dma.done %s362, 1536
        $region60: #{tpu_custom_call.1} parent=51 // pred_fallthru
          _
        %s370 = sand.u32 %s50, 1
        %s371 = scalar_lea.sflag [#allocation3], %s370
        %s372 = sand.u32 %s50, 1
        %s373 = smul.addr %s372, 96
        %s374 = scalar_lea.vmem [#allocation2], %s373
        %p375 = pneg %p63
        %p376 = pneg %p60
        %s377 = sand.u32 %s78, 1
        %s378 = scalar_lea.sflag [#allocation6], %s377
        %s379 = sand.u32 %s78, 1
        %s380 = smul.addr %s379, 96
        %s381 = scalar_lea.vmem [#allocation5], %s380
        %p382 = pneg %p91
        %p383 = pneg %p88
        %s384 = smul.u32 2, %s33
        %p385 = scmp.lt.s32.totalorder %s32, 1
        %s386 = scalar_select %p385, %s32, 1
        %p387 = scmp.lt.s32.totalorder %s384, 1
        %s388 = scalar_select %p387, %s384, 1
        %s389 = smul.addr %s386, 2
        %s390 = sadd.s32 %s388, %s389
        %s391 = smul.addr %s390, 4
        %s392 = scalar_lea.vmem %s2, %s391
        %p393 = pneg %p119
        %p394 = pneg %p116
        %p395 = pneg %p140
        %p396 = pneg %p137
        %p397 = pneg %p161
        %p398 = pneg %p158
        %p399 = pneg %p182
        %p400 = pneg %p179
        %p401 = pneg %p203
        %p402 = pneg %p200
        %p403 = pneg %p224
        %p404 = pneg %p221
        %p405 = pneg %p252
        %p406 = pneg %p249
        %s407 = sand.u32 %s239, 1
        %s408 = scalar_lea.sflag [#allocation4], %s407
        %s409 = sand.u32 %s239, 1
        %s410 = smul.addr %s409, 32
        %s411 = scalar_lea.vmem [#allocation7], %s410
        %s412 = smul.u32 2, %s33
        %s413 = smul.u32 2, %s33
        %s414 = smul.u32 2, %s33
        %p415 = scmp.lt.s32.totalorder %s32, 1
        %s416 = scalar_select %p415, %s32, 1
        %p417 = scmp.lt.s32.totalorder %s414, 1
        %s418 = scalar_select %p417, %s414, 1
        %s419 = smul.addr %s416, 2
        %s420 = sadd.s32 %s418, %s419
        %s421 = smul.addr %s420, 4
        %s422 = scalar_lea.vmem %s2, %s421
        %s423 = smul.u32 2, %s33
        %s424 = smul.u32 2, %s33
        %v426 = vld [vmem:[%s422] sm:$0x77]
        %vm427 = vcmp.gt.f32.partialorder %v426, 0.0
        %v428 = vsub.f32 0.0, %v426
        %v429 = vmul.f32 %v428, 1.442695
        %v430 = vpow.pop %v429
        %v431 = vsel %vm427, %v430, 0.0
        %v433 = vcombine.high %v431, %v431
        %vm435 = vcmask 1042432
        %v436 = vsel %vm435, %v431, 0.0
        %v437 = vrot.slane %v436, 4
        %v438 = vadd.f32 %v436, %v437
        %v439 = vrot.slane %v438, 2
        %v440 = vadd.f32 %v438, %v439
        %v441 = vrot.slane %v440, 1
        %v442 = vadd.f32 %v440, %v441
        %v443 = vsel %vm435, %v433, 0.0
        %v444 = vrot.slane %v443, 4
        %v445 = vadd.f32 %v443, %v444
        %v446 = vrot.slane %v445, 2
        %v447 = vadd.f32 %v445, %v446
        %v448 = vrot.slane %v447, 1
        %v449 = vadd.f32 %v447, %v448
        %v450 = vadd.f32 %v442, 1e-06
        %v451 = vadd.f32 %v449, 1e-06
        %v452 = vrcp.pop %v450
        %v453 = vrcp.pop %v451
        %v454 = vld [vmem:[%s3] sm:$0xf]
        %v455 = vld [vmem:[%s3 + $0x4] sm:$0xf]
        %v456 = vld [vmem:[%s3 + $0x8] sm:$0xf]
        %v457 = vld [vmem:[%s3 + $0xc] sm:$0xf]
        %v458 = vld [vmem:[%s356] sm:$0xff]
        %v459 = vld [vmem:[%s356 + $0x8] sm:$0xff]
        %v460 = vld [vmem:[%s356 + $0x10] sm:$0xff]
        %v461 = vld [vmem:[%s356 + $0x18] sm:$0xff]
        %v462 = vld [vmem:[%s4] sm:$0xf]
        %v463 = vld [vmem:[%s4 + $0x4] sm:$0xf]
        %v464 = vld [vmem:[%s4 + $0x8] sm:$0xf]
        %v465 = vld [vmem:[%s4 + $0xc] sm:$0xf]
        %v466 = vld [vmem:[%s365] sm:$0xff]
        %v467 = vld [vmem:[%s365 + $0x8] sm:$0xff]
        %v468 = vld [vmem:[%s365 + $0x10] sm:$0xff]
        %v469 = vld [vmem:[%s365 + $0x18] sm:$0xff]
        %v474 = vunpack.c.l.b16 %v462
        %v475 = vunpack.c.l.b16 %v463
        %v476 = vunpack.c.l.b16 %v464
        %v477 = vunpack.c.l.b16 %v465
        %v478 = vpack.c.b16 %v475, %v474
        %v479 = vpack.c.b16 %v477, %v476
        %v484 = vunpack.c.l.b16 %v466
        %v485 = vunpack.c.h.b16 %v466
        %v486 = vunpack.c.l.b16 %v467
        %v487 = vunpack.c.h.b16 %v467
        %v488 = vunpack.c.l.b16 %v468
        %v489 = vunpack.c.h.b16 %v468
        %v490 = vunpack.c.l.b16 %v469
        %v491 = vunpack.c.h.b16 %v469
        %v492 = vpack.c.b16 %v486, %v484
        %v493 = vpack.c.b16 %v487, %v485
        %v494 = vpack.c.b16 %v490, %v488
        %v495 = vpack.c.b16 %v491, %v489
        %vm500 = vcmask 261120
        %v502 = vsel %vm500, %v478, 0
        %v505 = vsel %vm500, %v479, 0
        %507 = vmatprep.subr.bf16.mxu0 %v493
        %508 = vmatpush1.bf16.msra.mxu0 %v492
        %509 = vmatprep.subr.bf16.mxu0 %v495
        %510 = vmatpush1.bf16.msra.mxu0 %v494
        %511 = vmatprep.subr.bf16.mxu0 0
        %512 = vmatpush1.bf16.msra.mxu0 0
        %513 = vmatprep.subr.bf16.mxu0 0
        %514 = vmatpush1.bf16.msra.mxu0 0
        %515 = vmatprep.subr.bf16.mxu0 0
        %516 = vmatpush1.bf16.msra.mxu0 0
        %517 = vmatprep.subr.bf16.mxu0 0
        %518 = vmatpush1.bf16.msra.mxu0 0
        %519 = vmatprep.subr.bf16.mxu0 0
        %520 = vmatpush1.bf16.msra.mxu0 0
        %521 = vmatprep.subr.bf16.mxu0 0
        %522 = vmatpush1.bf16.msra.mxu0 0
        %523 = vmatprep.subr.bf16.mxu0 0
        %524 = vmatpush1.bf16.msra.mxu0 0
        %525 = vmatprep.subr.bf16.mxu0 0
        %526 = vmatpush1.bf16.msra.mxu0 0
        %527 = vmatprep.subr.bf16.mxu0 0
        %528 = vmatpush1.bf16.msra.mxu0 0
        %529 = vmatprep.subr.bf16.mxu0 0
        %530 = vmatpush1.bf16.msra.mxu0 0
        %531 = vmatprep.subr.bf16.mxu0 0
        %532 = vmatpush1.bf16.msra.mxu0 0
        %533 = vmatprep.subr.bf16.mxu0 0
        %534 = vmatpush1.bf16.msra.mxu0 0
        %535 = vmatprep.subr.bf16.mxu0 0
        %536 = vmatpush1.bf16.msra.mxu0 0
        %537 = vmatprep.subr.bf16.mxu0 0
        %538 = vmatpush1.bf16.msra.mxu0 0
        %539 = vmatprep.mubr.bf16.mxu0 0
        %540 = vmatmul.mubr.bf16.gmra.mrb[0].mxu0 %v502
        %v541 = vpop.f32.mrb[0].mxu0
        %v542 = vadd.f32 0.0, %v541
        %v543 = vpop.f32.mrb[0].mxu0
        %v544 = vadd.f32 0.0, %v543
        %v545 = vpop.f32.mrb[0].mxu0
        %v546 = vadd.f32 0.0, %v545
        %v547 = vpop.f32.mrb[0].mxu0
        %v548 = vadd.f32 0.0, %v547
        %549 = vmatprep.mubr.bf16.mxu0 0
        %550 = vmatmul.mubr.bf16.gmra.mrb[0].mxu0 %v505
        %v551 = vpop.f32.mrb[0].mxu0
        %v552 = vadd.f32 0.0, %v551
        %v553 = vpop.f32.mrb[0].mxu0
        %v554 = vadd.f32 0.0, %v553
        %v555 = vpop.f32.mrb[0].mxu0
        %v556 = vadd.f32 0.0, %v555
        %v557 = vpop.f32.mrb[0].mxu0
        %v558 = vadd.f32 0.0, %v557
        %559 = vdwg.mxu0
        %v564 = vunpack.c.l.b16 %v454
        %v565 = vunpack.c.l.b16 %v455
        %v566 = vunpack.c.l.b16 %v456
        %v567 = vunpack.c.l.b16 %v457
        %v568 = vpack.c.b16 %v565, %v564
        %v569 = vpack.c.b16 %v567, %v566
        %v574 = vunpack.c.l.b16 %v458
        %v575 = vunpack.c.h.b16 %v458
        %v576 = vunpack.c.l.b16 %v459
        %v577 = vunpack.c.h.b16 %v459
        %v578 = vunpack.c.l.b16 %v460
        %v579 = vunpack.c.h.b16 %v460
        %v580 = vunpack.c.l.b16 %v461
        %v581 = vunpack.c.h.b16 %v461
        %v582 = vpack.c.b16 %v576, %v574
        %v583 = vpack.c.b16 %v577, %v575
        %v584 = vpack.c.b16 %v580, %v578
        %v585 = vpack.c.b16 %v581, %v579
        %v591 = vsel %vm500, %v568, 0
        %v594 = vsel %vm500, %v569, 0
        %596 = vmatprep.subr.bf16.mxu0 %v583
        %597 = vmatpush1.bf16.msra.mxu0 %v582
        %598 = vmatprep.subr.bf16.mxu0 %v585
        %599 = vmatpush1.bf16.msra.mxu0 %v584
        %600 = vmatprep.subr.bf16.mxu0 0
        %601 = vmatpush1.bf16.msra.mxu0 0
        %602 = vmatprep.subr.bf16.mxu0 0
        %603 = vmatpush1.bf16.msra.mxu0 0
        %604 = vmatprep.subr.bf16.mxu0 0
        %605 = vmatpush1.bf16.msra.mxu0 0
        %606 = vmatprep.subr.bf16.mxu0 0
        %607 = vmatpush1.bf16.msra.mxu0 0
        %608 = vmatprep.subr.bf16.mxu0 0
        %609 = vmatpush1.bf16.msra.mxu0 0
        %610 = vmatprep.subr.bf16.mxu0 0
        %611 = vmatpush1.bf16.msra.mxu0 0
        %612 = vmatprep.subr.bf16.mxu0 0
        %613 = vmatpush1.bf16.msra.mxu0 0
        %614 = vmatprep.subr.bf16.mxu0 0
        %615 = vmatpush1.bf16.msra.mxu0 0
        %616 = vmatprep.subr.bf16.mxu0 0
        %617 = vmatpush1.bf16.msra.mxu0 0
        %618 = vmatprep.subr.bf16.mxu0 0
        %619 = vmatpush1.bf16.msra.mxu0 0
        %620 = vmatprep.subr.bf16.mxu0 0
        %621 = vmatpush1.bf16.msra.mxu0 0
        %622 = vmatprep.subr.bf16.mxu0 0
        %623 = vmatpush1.bf16.msra.mxu0 0
        %624 = vmatprep.subr.bf16.mxu0 0
        %625 = vmatpush1.bf16.msra.mxu0 0
        %626 = vmatprep.subr.bf16.mxu0 0
        %627 = vmatpush1.bf16.msra.mxu0 0
        %628 = vmatprep.mubr.bf16.mxu0 0
        %629 = vmatmul.mubr.bf16.gmra.mrb[0].mxu0 %v591
        %v630 = vpop.f32.mrb[0].mxu0
        %v631 = vadd.f32 %v542, %v630
        %v632 = vpop.f32.mrb[0].mxu0
        %v633 = vadd.f32 %v544, %v632
        %v634 = vpop.f32.mrb[0].mxu0
        %v635 = vadd.f32 %v546, %v634
        %v636 = vpop.f32.mrb[0].mxu0
        %v637 = vadd.f32 %v548, %v636
        %638 = vmatprep.mubr.bf16.mxu0 0
        %639 = vmatmul.mubr.bf16.gmra.mrb[0].mxu0 %v594
        %v640 = vpop.f32.mrb[0].mxu0
        %v641 = vadd.f32 %v552, %v640
        %v642 = vpop.f32.mrb[0].mxu0
        %v643 = vadd.f32 %v554, %v642
        %v644 = vpop.f32.mrb[0].mxu0
        %v645 = vadd.f32 %v556, %v644
        %v646 = vpop.f32.mrb[0].mxu0
        %v647 = vadd.f32 %v558, %v646
        %648 = vdwg.mxu0
        %v649 = vld [vmem:[%s5] sm:$0xff]
        %v650 = vld [vmem:[%s5 + $0x8] sm:$0xff]
        %v651 = vld [vmem:[%s5 + $0x10] sm:$0xff]
        %v652 = vld [vmem:[%s5 + $0x18] sm:$0xff]
        %654 = vset.pattern.permute.xlu0 0
        %655 = vperm.xlu0 %654, %v649
        %v656 = vpop.permute.xlu0 %655
        %659 = vset.pattern.permute.xlu0 0
        %660 = vperm.xlu0 %659, %v650
        %v661 = vpop.permute.xlu0 %660
        %664 = vset.pattern.permute.xlu0 0
        %665 = vperm.xlu0 %664, %v651
        %v666 = vpop.permute.xlu0 %665
        %669 = vset.pattern.permute.xlu0 0
        %670 = vperm.xlu0 %669, %v652
        %v671 = vpop.permute.xlu0 %670
        %v673 = vadd.f32 %v631, %v656
        %v674 = vadd.f32 %v633, %v656
        %v675 = vadd.f32 %v635, %v661
        %v676 = vadd.f32 %v637, %v661
        %v677 = vadd.f32 %v641, %v666
        %v678 = vadd.f32 %v643, %v666
        %v679 = vadd.f32 %v645, %v671
        %v680 = vadd.f32 %v647, %v671
        %v681 = vmax.f32 %v673, 0.0
        %v682 = vmax.f32 %v674, 0.0
        %v683 = vmax.f32 %v675, 0.0
        %v684 = vmax.f32 %v676, 0.0
        %v685 = vmax.f32 %v677, 0.0
        %v686 = vmax.f32 %v678, 0.0
        %v687 = vmax.f32 %v679, 0.0
        %v688 = vmax.f32 %v680, 0.0
        %v689 = vlaneseq
        %v690 = vshrl.u32 %v689, 7
        %v691 = vsub.s32 0, %v690
        %v692 = vrot.slane %v431, %v691
        %v693 = vlaneseq
        %v694 = vshrl.u32 %v693, 7
        %v695 = vsub.s32 4, %v694
        %v696 = vrot.slane %v431, %v695
        %v699 = vlaneseq
        %v700 = vshrl.u32 %v699, 7
        %v701 = vsub.s32 0, %v700
        %v702 = vrot.slane %v692, %v701
        %v703 = vlaneseq
        %v704 = vshrl.u32 %v703, 7
        %v705 = vsub.s32 0, %v704
        %v706 = vrot.slane %v696, %v705
        %v707 = vmul.f32 %v702, %v681
        %v708 = vmul.f32 %v706, %v682
        %v709 = vmul.f32 %v702, %v683
        %v710 = vmul.f32 %v706, %v684
        %v711 = vmul.f32 %v702, %v685
        %v712 = vmul.f32 %v706, %v686
        %v713 = vmul.f32 %v702, %v687
        %v714 = vmul.f32 %v706, %v688
        %s715 = scalar_lea.vmem %s356, 32 [#allocation2]
        %v716 = vld [vmem:[%s715] sm:$0xff]
        %v717 = vld [vmem:[%s715 + $0x8] sm:$0xff]
        %v718 = vld [vmem:[%s715 + $0x10] sm:$0xff]
        %v719 = vld [vmem:[%s715 + $0x18] sm:$0xff]
        %s720 = scalar_lea.vmem %s365, 32 [#allocation5]
        %v721 = vld [vmem:[%s720] sm:$0xff]
        %v722 = vld [vmem:[%s720 + $0x8] sm:$0xff]
        %v723 = vld [vmem:[%s720 + $0x10] sm:$0xff]
        %v724 = vld [vmem:[%s720 + $0x18] sm:$0xff]
        %v729 = vunpack.c.l.b16 %v721
        %v730 = vunpack.c.h.b16 %v721
        %v731 = vunpack.c.l.b16 %v722
        %v732 = vunpack.c.h.b16 %v722
        %v733 = vunpack.c.l.b16 %v723
        %v734 = vunpack.c.h.b16 %v723
        %v735 = vunpack.c.l.b16 %v724
        %v736 = vunpack.c.h.b16 %v724
        %v737 = vpack.c.b16 %v731, %v729
        %v738 = vpack.c.b16 %v732, %v730
        %v739 = vpack.c.b16 %v735, %v733
        %v740 = vpack.c.b16 %v736, %v734
        %745 = vmatprep.subr.bf16.mxu0 %v738
        %746 = vmatpush1.bf16.msra.mxu0 %v737
        %747 = vmatprep.subr.bf16.mxu0 %v740
        %748 = vmatpush1.bf16.msra.mxu0 %v739
        %749 = vmatprep.subr.bf16.mxu0 0
        %750 = vmatpush1.bf16.msra.mxu0 0
        %751 = vmatprep.subr.bf16.mxu0 0
        %752 = vmatpush1.bf16.msra.mxu0 0
        %753 = vmatprep.subr.bf16.mxu0 0
        %754 = vmatpush1.bf16.msra.mxu0 0
        %755 = vmatprep.subr.bf16.mxu0 0
        %756 = vmatpush1.bf16.msra.mxu0 0
        %757 = vmatprep.subr.bf16.mxu0 0
        %758 = vmatpush1.bf16.msra.mxu0 0
        %759 = vmatprep.subr.bf16.mxu0 0
        %760 = vmatpush1.bf16.msra.mxu0 0
        %761 = vmatprep.subr.bf16.mxu0 0
        %762 = vmatpush1.bf16.msra.mxu0 0
        %763 = vmatprep.subr.bf16.mxu0 0
        %764 = vmatpush1.bf16.msra.mxu0 0
        %765 = vmatprep.subr.bf16.mxu0 0
        %766 = vmatpush1.bf16.msra.mxu0 0
        %767 = vmatprep.subr.bf16.mxu0 0
        %768 = vmatpush1.bf16.msra.mxu0 0
        %769 = vmatprep.subr.bf16.mxu0 0
        %770 = vmatpush1.bf16.msra.mxu0 0
        %771 = vmatprep.subr.bf16.mxu0 0
        %772 = vmatpush1.bf16.msra.mxu0 0
        %773 = vmatprep.subr.bf16.mxu0 0
        %774 = vmatpush1.bf16.msra.mxu0 0
        %775 = vmatprep.subr.bf16.mxu0 0
        %776 = vmatpush1.bf16.msra.mxu0 0
        %777 = vmatprep.mubr.bf16.mxu0 0
        %778 = vmatmul.mubr.bf16.gmra.mrb[0].mxu0 %v502
        %v779 = vpop.f32.mrb[0].mxu0
        %v780 = vadd.f32 0.0, %v779
        %v781 = vpop.f32.mrb[0].mxu0
        %v782 = vadd.f32 0.0, %v781
        %v783 = vpop.f32.mrb[0].mxu0
        %v784 = vadd.f32 0.0, %v783
        %v785 = vpop.f32.mrb[0].mxu0
        %v786 = vadd.f32 0.0, %v785
        %787 = vmatprep.mubr.bf16.mxu0 0
        %788 = vmatmul.mubr.bf16.gmra.mrb[0].mxu0 %v505
        %v789 = vpop.f32.mrb[0].mxu0
        %v790 = vadd.f32 0.0, %v789
        %v791 = vpop.f32.mrb[0].mxu0
        %v792 = vadd.f32 0.0, %v791
        %v793 = vpop.f32.mrb[0].mxu0
        %v794 = vadd.f32 0.0, %v793
        %v795 = vpop.f32.mrb[0].mxu0
        %v796 = vadd.f32 0.0, %v795
        %797 = vdwg.mxu0
        %v802 = vunpack.c.l.b16 %v716
        %v803 = vunpack.c.h.b16 %v716
        %v804 = vunpack.c.l.b16 %v717
        %v805 = vunpack.c.h.b16 %v717
        %v806 = vunpack.c.l.b16 %v718
        %v807 = vunpack.c.h.b16 %v718
        %v808 = vunpack.c.l.b16 %v719
        %v809 = vunpack.c.h.b16 %v719
        %v810 = vpack.c.b16 %v804, %v802
        %v811 = vpack.c.b16 %v805, %v803
        %v812 = vpack.c.b16 %v808, %v806
        %v813 = vpack.c.b16 %v809, %v807
        %818 = vmatprep.subr.bf16.mxu0 %v811
        %819 = vmatpush1.bf16.msra.mxu0 %v810
        %820 = vmatprep.subr.bf16.mxu0 %v813
        %821 = vmatpush1.bf16.msra.mxu0 %v812
        %822 = vmatprep.subr.bf16.mxu0 0
        %823 = vmatpush1.bf16.msra.mxu0 0
        %824 = vmatprep.subr.bf16.mxu0 0
        %825 = vmatpush1.bf16.msra.mxu0 0
        %826 = vmatprep.subr.bf16.mxu0 0
        %827 = vmatpush1.bf16.msra.mxu0 0
        %828 = vmatprep.subr.bf16.mxu0 0
        %829 = vmatpush1.bf16.msra.mxu0 0
        %830 = vmatprep.subr.bf16.mxu0 0
        %831 = vmatpush1.bf16.msra.mxu0 0
        %832 = vmatprep.subr.bf16.mxu0 0
        %833 = vmatpush1.bf16.msra.mxu0 0
        %834 = vmatprep.subr.bf16.mxu0 0
        %835 = vmatpush1.bf16.msra.mxu0 0
        %836 = vmatprep.subr.bf16.mxu0 0
        %837 = vmatpush1.bf16.msra.mxu0 0
        %838 = vmatprep.subr.bf16.mxu0 0
        %839 = vmatpush1.bf16.msra.mxu0 0
        %840 = vmatprep.subr.bf16.mxu0 0
        %841 = vmatpush1.bf16.msra.mxu0 0
        %842 = vmatprep.subr.bf16.mxu0 0
        %843 = vmatpush1.bf16.msra.mxu0 0
        %844 = vmatprep.subr.bf16.mxu0 0
        %845 = vmatpush1.bf16.msra.mxu0 0
        %846 = vmatprep.subr.bf16.mxu0 0
        %847 = vmatpush1.bf16.msra.mxu0 0
        %848 = vmatprep.subr.bf16.mxu0 0
        %849 = vmatpush1.bf16.msra.mxu0 0
        %850 = vmatprep.mubr.bf16.mxu0 0
        %851 = vmatmul.mubr.bf16.gmra.mrb[0].mxu0 %v591
        %v852 = vpop.f32.mrb[0].mxu0
        %v853 = vadd.f32 %v780, %v852
        %v854 = vpop.f32.mrb[0].mxu0
        %v855 = vadd.f32 %v782, %v854
        %v856 = vpop.f32.mrb[0].mxu0
        %v857 = vadd.f32 %v784, %v856
        %v858 = vpop.f32.mrb[0].mxu0
        %v859 = vadd.f32 %v786, %v858
        %860 = vmatprep.mubr.bf16.mxu0 0
        %861 = vmatmul.mubr.bf16.gmra.mrb[0].mxu0 %v594
        %v862 = vpop.f32.mrb[0].mxu0
        %v863 = vadd.f32 %v790, %v862
        %v864 = vpop.f32.mrb[0].mxu0
        %v865 = vadd.f32 %v792, %v864
        %v866 = vpop.f32.mrb[0].mxu0
        %v867 = vadd.f32 %v794, %v866
        %v868 = vpop.f32.mrb[0].mxu0
        %v869 = vadd.f32 %v796, %v868
        %870 = vdwg.mxu0
        %v871 = vadd.f32 %v853, %v656
        %v872 = vadd.f32 %v855, %v656
        %v873 = vadd.f32 %v857, %v661
        %v874 = vadd.f32 %v859, %v661
        %v875 = vadd.f32 %v863, %v666
        %v876 = vadd.f32 %v865, %v666
        %v877 = vadd.f32 %v867, %v671
        %v878 = vadd.f32 %v869, %v671
        %v879 = vmax.f32 %v871, 0.0
        %v880 = vmax.f32 %v872, 0.0
        %v881 = vmax.f32 %v873, 0.0
        %v882 = vmax.f32 %v874, 0.0
        %v883 = vmax.f32 %v875, 0.0
        %v884 = vmax.f32 %v876, 0.0
        %v885 = vmax.f32 %v877, 0.0
        %v886 = vmax.f32 %v878, 0.0
        %v887 = vlaneseq
        %v888 = vshrl.u32 %v887, 7
        %v889 = vsub.s32 1, %v888
        %v890 = vrot.slane %v431, %v889
        %v891 = vlaneseq
        %v892 = vshrl.u32 %v891, 7
        %v893 = vsub.s32 5, %v892
        %v894 = vrot.slane %v431, %v893
        %v897 = vlaneseq
        %v898 = vshrl.u32 %v897, 7
        %v899 = vsub.s32 1, %v898
        %v900 = vrot.slane %v890, %v899
        %v901 = vlaneseq
        %v902 = vshrl.u32 %v901, 7
        %v903 = vsub.s32 1, %v902
        %v904 = vrot.slane %v894, %v903
        %v905 = vmul.f32 %v900, %v879
        %v906 = vmul.f32 %v904, %v880
        %v907 = vmul.f32 %v900, %v881
        %v908 = vmul.f32 %v904, %v882
        %v909 = vmul.f32 %v900, %v883
        %v910 = vmul.f32 %v904, %v884
        %v911 = vmul.f32 %v900, %v885
        %v912 = vmul.f32 %v904, %v886
        %v913 = vadd.f32 %v707, %v905
        %v914 = vadd.f32 %v708, %v906
        %v915 = vadd.f32 %v709, %v907
        %v916 = vadd.f32 %v710, %v908
        %v917 = vadd.f32 %v711, %v909
        %v918 = vadd.f32 %v712, %v910
        %v919 = vadd.f32 %v713, %v911
        %v920 = vadd.f32 %v714, %v912
        %s921 = scalar_lea.vmem %s356, 64 [#allocation2]
        %v922 = vld [vmem:[%s921] sm:$0xff]
        %v923 = vld [vmem:[%s921 + $0x8] sm:$0xff]
        %v924 = vld [vmem:[%s921 + $0x10] sm:$0xff]
        %v925 = vld [vmem:[%s921 + $0x18] sm:$0xff]
        %s926 = scalar_lea.vmem %s365, 64 [#allocation5]
        %v927 = vld [vmem:[%s926] sm:$0xff]
        %v928 = vld [vmem:[%s926 + $0x8] sm:$0xff]
        %v929 = vld [vmem:[%s926 + $0x10] sm:$0xff]
        %v930 = vld [vmem:[%s926 + $0x18] sm:$0xff]
        %v935 = vunpack.c.l.b16 %v927
        %v936 = vunpack.c.h.b16 %v927
        %v937 = vunpack.c.l.b16 %v928
        %v938 = vunpack.c.h.b16 %v928
        %v939 = vunpack.c.l.b16 %v929
        %v940 = vunpack.c.h.b16 %v929
        %v941 = vunpack.c.l.b16 %v930
        %v942 = vunpack.c.h.b16 %v930
        %v943 = vpack.c.b16 %v937, %v935
        %v944 = vpack.c.b16 %v938, %v936
        %v945 = vpack.c.b16 %v941, %v939
        %v946 = vpack.c.b16 %v942, %v940
        %951 = vmatprep.subr.bf16.mxu0 %v944
        %952 = vmatpush1.bf16.msra.mxu0 %v943
        %953 = vmatprep.subr.bf16.mxu0 %v946
        %954 = vmatpush1.bf16.msra.mxu0 %v945
        %955 = vmatprep.subr.bf16.mxu0 0
        %956 = vmatpush1.bf16.msra.mxu0 0
        %957 = vmatprep.subr.bf16.mxu0 0
        %958 = vmatpush1.bf16.msra.mxu0 0
        %959 = vmatprep.subr.bf16.mxu0 0
        %960 = vmatpush1.bf16.msra.mxu0 0
        %961 = vmatprep.subr.bf16.mxu0 0
        %962 = vmatpush1.bf16.msra.mxu0 0
        %963 = vmatprep.subr.bf16.mxu0 0
        %964 = vmatpush1.bf16.msra.mxu0 0
        %965 = vmatprep.subr.bf16.mxu0 0
        %966 = vmatpush1.bf16.msra.mxu0 0
        %967 = vmatprep.subr.bf16.mxu0 0
        %968 = vmatpush1.bf16.msra.mxu0 0
        %969 = vmatprep.subr.bf16.mxu0 0
        %970 = vmatpush1.bf16.msra.mxu0 0
        %971 = vmatprep.subr.bf16.mxu0 0
        %972 = vmatpush1.bf16.msra.mxu0 0
        %973 = vmatprep.subr.bf16.mxu0 0
        %974 = vmatpush1.bf16.msra.mxu0 0
        %975 = vmatprep.subr.bf16.mxu0 0
        %976 = vmatpush1.bf16.msra.mxu0 0
        %977 = vmatprep.subr.bf16.mxu0 0
        %978 = vmatpush1.bf16.msra.mxu0 0
        %979 = vmatprep.subr.bf16.mxu0 0
        %980 = vmatpush1.bf16.msra.mxu0 0
        %981 = vmatprep.subr.bf16.mxu0 0
        %982 = vmatpush1.bf16.msra.mxu0 0
        %983 = vmatprep.mubr.bf16.mxu0 0
        %984 = vmatmul.mubr.bf16.gmra.mrb[0].mxu0 %v502
        %v985 = vpop.f32.mrb[0].mxu0
        %v986 = vadd.f32 0.0, %v985
        %v987 = vpop.f32.mrb[0].mxu0
        %v988 = vadd.f32 0.0, %v987
        %v989 = vpop.f32.mrb[0].mxu0
        %v990 = vadd.f32 0.0, %v989
        %v991 = vpop.f32.mrb[0].mxu0
        %v992 = vadd.f32 0.0, %v991
        %993 = vmatprep.mubr.bf16.mxu0 0
        %994 = vmatmul.mubr.bf16.gmra.mrb[0].mxu0 %v505
        %v995 = vpop.f32.mrb[0].mxu0
        %v996 = vadd.f32 0.0, %v995
        %v997 = vpop.f32.mrb[0].mxu0
        %v998 = vadd.f32 0.0, %v997
        %v999 = vpop.f32.mrb[0].mxu0
        %v1000 = vadd.f32 0.0, %v999
        %v1001 = vpop.f32.mrb[0].mxu0
        %v1002 = vadd.f32 0.0, %v1001
        %1003 = vdwg.mxu0
        %v1008 = vunpack.c.l.b16 %v922
        %v1009 = vunpack.c.h.b16 %v922
        %v1010 = vunpack.c.l.b16 %v923
        %v1011 = vunpack.c.h.b16 %v923
        %v1012 = vunpack.c.l.b16 %v924
        %v1013 = vunpack.c.h.b16 %v924
        %v1014 = vunpack.c.l.b16 %v925
        %v1015 = vunpack.c.h.b16 %v925
        %v1016 = vpack.c.b16 %v1010, %v1008
        %v1017 = vpack.c.b16 %v1011, %v1009
        %v1018 = vpack.c.b16 %v1014, %v1012
        %v1019 = vpack.c.b16 %v1015, %v1013
        %1024 = vmatprep.subr.bf16.mxu0 %v1017
        %1025 = vmatpush1.bf16.msra.mxu0 %v1016
        %1026 = vmatprep.subr.bf16.mxu0 %v1019
        %1027 = vmatpush1.bf16.msra.mxu0 %v1018
        %1028 = vmatprep.subr.bf16.mxu0 0
        %1029 = vmatpush1.bf16.msra.mxu0 0
        %1030 = vmatprep.subr.bf16.mxu0 0
        %1031 = vmatpush1.bf16.msra.mxu0 0
        %1032 = vmatprep.subr.bf16.mxu0 0
        %1033 = vmatpush1.bf16.msra.mxu0 0
        %1034 = vmatprep.subr.bf16.mxu0 0
        %1035 = vmatpush1.bf16.msra.mxu0 0
        %1036 = vmatprep.subr.bf16.mxu0 0
        %1037 = vmatpush1.bf16.msra.mxu0 0
        %1038 = vmatprep.subr.bf16.mxu0 0
        %1039 = vmatpush1.bf16.msra.mxu0 0
        %1040 = vmatprep.subr.bf16.mxu0 0
        %1041 = vmatpush1.bf16.msra.mxu0 0
        %1042 = vmatprep.subr.bf16.mxu0 0
        %1043 = vmatpush1.bf16.msra.mxu0 0
        %1044 = vmatprep.subr.bf16.mxu0 0
        %1045 = vmatpush1.bf16.msra.mxu0 0
        %1046 = vmatprep.subr.bf16.mxu0 0
        %1047 = vmatpush1.bf16.msra.mxu0 0
        %1048 = vmatprep.subr.bf16.mxu0 0
        %1049 = vmatpush1.bf16.msra.mxu0 0
        %1050 = vmatprep.subr.bf16.mxu0 0
        %1051 = vmatpush1.bf16.msra.mxu0 0
        %1052 = vmatprep.subr.bf16.mxu0 0
        %1053 = vmatpush1.bf16.msra.mxu0 0
        %1054 = vmatprep.subr.bf16.mxu0 0
        %1055 = vmatpush1.bf16.msra.mxu0 0
        %1056 = vmatprep.mubr.bf16.mxu0 0
        %1057 = vmatmul.mubr.bf16.gmra.mrb[0].mxu0 %v591
        %v1058 = vpop.f32.mrb[0].mxu0
        %v1059 = vadd.f32 %v986, %v1058
        %v1060 = vpop.f32.mrb[0].mxu0
        %v1061 = vadd.f32 %v988, %v1060
        %v1062 = vpop.f32.mrb[0].mxu0
        %v1063 = vadd.f32 %v990, %v1062
        %v1064 = vpop.f32.mrb[0].mxu0
        %v1065 = vadd.f32 %v992, %v1064
        %1066 = vmatprep.mubr.bf16.mxu0 0
        %1067 = vmatmul.mubr.bf16.gmra.mrb[0].mxu0 %v594
        %v1068 = vpop.f32.mrb[0].mxu0
        %v1069 = vadd.f32 %v996, %v1068
        %v1070 = vpop.f32.mrb[0].mxu0
        %v1071 = vadd.f32 %v998, %v1070
        %v1072 = vpop.f32.mrb[0].mxu0
        %v1073 = vadd.f32 %v1000, %v1072
        %v1074 = vpop.f32.mrb[0].mxu0
        %v1075 = vadd.f32 %v1002, %v1074
        %1076 = vdwg.mxu0
        %v1077 = vadd.f32 %v1059, %v656
        %v1078 = vadd.f32 %v1061, %v656
        %v1079 = vadd.f32 %v1063, %v661
        %v1080 = vadd.f32 %v1065, %v661
        %v1081 = vadd.f32 %v1069, %v666
        %v1082 = vadd.f32 %v1071, %v666
        %v1083 = vadd.f32 %v1073, %v671
        %v1084 = vadd.f32 %v1075, %v671
        %v1085 = vmax.f32 %v1077, 0.0
        %v1086 = vmax.f32 %v1078, 0.0
        %v1087 = vmax.f32 %v1079, 0.0
        %v1088 = vmax.f32 %v1080, 0.0
        %v1089 = vmax.f32 %v1081, 0.0
        %v1090 = vmax.f32 %v1082, 0.0
        %v1091 = vmax.f32 %v1083, 0.0
        %v1092 = vmax.f32 %v1084, 0.0
        %v1093 = vlaneseq
        %v1094 = vshrl.u32 %v1093, 7
        %v1095 = vsub.s32 2, %v1094
        %v1096 = vrot.slane %v431, %v1095
        %v1097 = vlaneseq
        %v1098 = vshrl.u32 %v1097, 7
        %v1099 = vsub.s32 6, %v1098
        %v1100 = vrot.slane %v431, %v1099
        %v1103 = vlaneseq
        %v1104 = vshrl.u32 %v1103, 7
        %v1105 = vsub.s32 2, %v1104
        %v1106 = vrot.slane %v1096, %v1105
        %v1107 = vlaneseq
        %v1108 = vshrl.u32 %v1107, 7
        %v1109 = vsub.s32 2, %v1108
        %v1110 = vrot.slane %v1100, %v1109
        %v1111 = vmul.f32 %v1106, %v1085
        %v1112 = vmul.f32 %v1110, %v1086
        %v1113 = vmul.f32 %v1106, %v1087
        %v1114 = vmul.f32 %v1110, %v1088
        %v1115 = vmul.f32 %v1106, %v1089
        %v1116 = vmul.f32 %v1110, %v1090
        %v1117 = vmul.f32 %v1106, %v1091
        %v1118 = vmul.f32 %v1110, %v1092
        %v1119 = vadd.f32 %v913, %v1111
        %v1120 = vadd.f32 %v914, %v1112
        %v1121 = vadd.f32 %v915, %v1113
        %v1122 = vadd.f32 %v916, %v1114
        %v1123 = vadd.f32 %v917, %v1115
        %v1124 = vadd.f32 %v918, %v1116
        %v1125 = vadd.f32 %v919, %v1117
        %v1126 = vadd.f32 %v920, %v1118
        %v1127 = vld [vmem:[%s6] sm:$0xf]
        %v1128 = vld [vmem:[%s6 + $0x4] sm:$0xf]
        %v1129 = vld [vmem:[%s6 + $0x8] sm:$0xf]
        %v1130 = vld [vmem:[%s6 + $0xc] sm:$0xf]
        %v1131 = vpack.c.bf16 %v1121, %v1119
        %v1132 = vpack.c.bf16 %v1122, %v1120
        %v1133 = vpack.c.bf16 %v1125, %v1123
        %v1134 = vpack.c.bf16 %v1126, %v1124
        %v1139 = vunpack.c.l.b16 %v1127
        %v1140 = vunpack.c.l.b16 %v1128
        %v1141 = vunpack.c.l.b16 %v1129
        %v1142 = vunpack.c.l.b16 %v1130
        %v1143 = vpack.c.b16 %v1140, %v1139
        %v1144 = vpack.c.b16 %v1142, %v1141
        %v1146 = vsel %vm500, %v1143, 0
        %v1149 = vsel %vm500, %v1144, 0
        %1151 = vmatprep.subr.bf16.mxu0 %v1132
        %1152 = vmatpush1.bf16.msra.mxu0 %v1131
        %1153 = vmatprep.subr.bf16.mxu0 %v1134
        %1154 = vmatpush1.bf16.msra.mxu0 %v1133
        %1155 = vmatprep.subr.bf16.mxu0 0
        %1156 = vmatpush1.bf16.msra.mxu0 0
        %1157 = vmatprep.subr.bf16.mxu0 0
        %1158 = vmatpush1.bf16.msra.mxu0 0
        %1159 = vmatprep.subr.bf16.mxu0 0
        %1160 = vmatpush1.bf16.msra.mxu0 0
        %1161 = vmatprep.subr.bf16.mxu0 0
        %1162 = vmatpush1.bf16.msra.mxu0 0
        %1163 = vmatprep.subr.bf16.mxu0 0
        %1164 = vmatpush1.bf16.msra.mxu0 0
        %1165 = vmatprep.subr.bf16.mxu0 0
        %1166 = vmatpush1.bf16.msra.mxu0 0
        %1167 = vmatprep.subr.bf16.mxu0 0
        %1168 = vmatpush1.bf16.msra.mxu0 0
        %1169 = vmatprep.subr.bf16.mxu0 0
        %1170 = vmatpush1.bf16.msra.mxu0 0
        %1171 = vmatprep.subr.bf16.mxu0 0
        %1172 = vmatpush1.bf16.msra.mxu0 0
        %1173 = vmatprep.subr.bf16.mxu0 0
        %1174 = vmatpush1.bf16.msra.mxu0 0
        %1175 = vmatprep.subr.bf16.mxu0 0
        %1176 = vmatpush1.bf16.msra.mxu0 0
        %1177 = vmatprep.subr.bf16.mxu0 0
        %1178 = vmatpush1.bf16.msra.mxu0 0
        %1179 = vmatprep.subr.bf16.mxu0 0
        %1180 = vmatpush1.bf16.msra.mxu0 0
        %1181 = vmatprep.subr.bf16.mxu0 0
        %1182 = vmatpush1.bf16.msra.mxu0 0
        %1183 = vmatprep.mubr.bf16.mxu0 0
        %1184 = vmatmul.mubr.bf16.gmra.mrb[0].mxu0 %v1146
        %v1185 = vpop.f32.mrb[0].mxu0
        %v1186 = vadd.f32 0.0, %v1185
        %v1187 = vpop.f32.mrb[0].mxu0
        %v1188 = vadd.f32 0.0, %v1187
        %v1189 = vpop.f32.mrb[0].mxu0
        %v1190 = vadd.f32 0.0, %v1189
        %v1191 = vpop.f32.mrb[0].mxu0
        %v1192 = vadd.f32 0.0, %v1191
        %1193 = vmatprep.mubr.bf16.mxu0 0
        %1194 = vmatmul.mubr.bf16.gmra.mrb[0].mxu0 %v1149
        %v1195 = vpop.f32.mrb[0].mxu0
        %v1196 = vadd.f32 0.0, %v1195
        %v1197 = vpop.f32.mrb[0].mxu0
        %v1198 = vadd.f32 0.0, %v1197
        %v1199 = vpop.f32.mrb[0].mxu0
        %v1200 = vadd.f32 0.0, %v1199
        %v1201 = vpop.f32.mrb[0].mxu0
        %v1202 = vadd.f32 0.0, %v1201
        %1203 = vdwg.mxu0
        %v1204 = vmul.f32 %v1186, %v452
        %v1205 = vmul.f32 %v1188, %v453
        %v1206 = vmul.f32 %v1190, %v452
        %v1207 = vmul.f32 %v1192, %v453
        %v1208 = vmul.f32 %v1196, %v452
        %v1209 = vmul.f32 %v1198, %v453
        %v1210 = vmul.f32 %v1200, %v452
        %v1211 = vmul.f32 %v1202, %v453
        %v1212 = vld [vmem:[%s7] sm:$0xff]
        %v1213 = vld [vmem:[%s7 + $0x8] sm:$0xff]
        %v1214 = vld [vmem:[%s7 + $0x10] sm:$0xff]
        %v1215 = vld [vmem:[%s7 + $0x18] sm:$0xff]
        %1217 = vset.pattern.permute.xlu0 0
        %1218 = vperm.xlu0 %1217, %v1212
        %v1219 = vpop.permute.xlu0 %1218
        %1222 = vset.pattern.permute.xlu0 0
        %1223 = vperm.xlu0 %1222, %v1213
        %v1224 = vpop.permute.xlu0 %1223
        %1227 = vset.pattern.permute.xlu0 0
        %1228 = vperm.xlu0 %1227, %v1214
        %v1229 = vpop.permute.xlu0 %1228
        %1232 = vset.pattern.permute.xlu0 0
        %1233 = vperm.xlu0 %1232, %v1215
        %v1234 = vpop.permute.xlu0 %1233
        %v1236 = vadd.f32 %v1204, %v1219
        %v1237 = vadd.f32 %v1205, %v1219
        %v1238 = vadd.f32 %v1206, %v1224
        %v1239 = vadd.f32 %v1207, %v1224
        %v1240 = vadd.f32 %v1208, %v1229
        %v1241 = vadd.f32 %v1209, %v1229
        %v1242 = vadd.f32 %v1210, %v1234
        %v1243 = vadd.f32 %v1211, %v1234
        %v1244 = vpack.c.bf16 %v1238, %v1236
        %v1245 = vpack.c.bf16 %v1239, %v1237
        %v1246 = vpack.c.bf16 %v1242, %v1240
        %v1247 = vpack.c.bf16 %v1243, %v1241
        %v1252 = vunpack.c.l.b16 %v1244
        %v1253 = vunpack.c.l.b16 %v1245
        %v1254 = vunpack.c.h.b16 %v1244
        %v1255 = vunpack.c.h.b16 %v1245
        %v1256 = vunpack.c.l.b16 %v1246
        %v1257 = vunpack.c.l.b16 %v1247
        %v1258 = vunpack.c.h.b16 %v1246
        %v1259 = vunpack.c.h.b16 %v1247
        %v1260 = vpack.c.b16 %v1253, %v1252
        %v1261 = vpack.c.b16 %v1255, %v1254
        %v1262 = vpack.c.b16 %v1257, %v1256
        %v1263 = vpack.c.b16 %v1259, %v1258
        %1268 = vst [vmem:[%s411] sm:$0xff] %v1260
        %1269 = vst [vmem:[%s411 + $0x8] sm:$0xff] %v1261
        %1270 = vst [vmem:[%s411 + $0x10] sm:$0xff] %v1262
        %1271 = vst [vmem:[%s411 + $0x18] sm:$0xff] %v1263
        %s1272 = sand.u32 %s239, 1
        %s1273 = scalar_lea.sflag [#allocation4], %s1272
        %s1274 = sand.u32 %s239, 1
        %s1275 = smul.addr %s1274, 32
        %s1276 = scalar_lea.vmem [#allocation7], %s1275
        // Predicated region
        $region61: #{tpu_custom_call.1} parent=51 // pred_check
          %p1277 = pneg %p249
        $region62: #{tpu_custom_call.1} parent=51 // pred_check_branch
          %1279 = sbr.rel (%p1277) target = $region64
        $region63: #{tpu_custom_call.1} parent=51 // pred_region
          %s1280 = smul.u32 2, %s33
          %s1282 = ssub.s32 512, 512
          %1283 = vsyncadd %s1273, %s1282
          %s1284 = smul.addr %s32, 8
          %s1285 = sadd.s32 %s1280, %s1284
          %s1286 = smul.addr %s1285, 64
          %s1287 = scalar_lea.hbm %s8, %s1286
          %s1288 = sshll.u32 %s1276, 4
          %s1289 = int_to_ptr.vmem [resolvable:$true] %s1288
          %1294 = dma.vmem_to_hbm [thread:$0]  %s1289, 512, %s1287, %s1273, 128, 128, 8
        $region64: #{tpu_custom_call.1} parent=51 // pred_fallthru
          _
      $region52: #{tpu_custom_call.1} parent=5 // pred_fallthru
        _
      %p1295 = scmp.le.s32.totalorder 2, %s23
      // Predicated region
      $region65: #{tpu_custom_call.1} parent=5 // pred_check
        %p1296 = pneg %p1295
      $region66: #{tpu_custom_call.1} parent=5 // pred_check_branch
        %1298 = sbr.rel (%p1296) target = $region68
      $region67: #{tpu_custom_call.1} parent=5 // pred_region
        %s1299 = ssub.s32 %s23, 2
        // Predicated region
        $region69: #{tpu_custom_call.1} parent=67 // pred_check
          %p1300 = pneg %p255
        $region70: #{tpu_custom_call.1} parent=67 // pred_check_branch
          %1302 = sbr.rel (%p1300) target = $region72
        $region71: #{tpu_custom_call.1} parent=67 // pred_region
          %s1303 = sand.u32 %s240, 1
          %s1304 = scalar_lea.sflag [#allocation4], %s1303
          %s1305 = sand.u32 %s240, 1
          %s1306 = smul.addr %s1305, 32
          %s1307 = scalar_lea.vmem [#allocation7], %s1306
          %1308 = dma.done %s1304, 512
        $region72: #{tpu_custom_call.1} parent=67 // pred_fallthru
          _
      $region68: #{tpu_custom_call.1} parent=5 // pred_fallthru
        _
    $region6: #{tpu_custom_call.1} parent=1 // loop_footer
      %s27 = sadd.s32 1, %s23
    $region7: #{tpu_custom_call.1} parent=1 // loop_footer_branch
      %22 = sbr.rel target = $region3
    $region8: #{tpu_custom_call.1} parent=1 // loop_exit
      _
    %1309 = vsyncpa [#allocation3], 1
    %s1310 = scalar_lea.sflag [#allocation3], 1
    %1311 = vsyncpa %s1310, 1
    %1312 = vsyncpa [#allocation6], 1
    %s1313 = scalar_lea.sflag [#allocation6], 1
    %1314 = vsyncpa %s1313, 1
    %1315 = vsyncpa [#allocation4], 1
    %s1316 = scalar_lea.sflag [#allocation4], 1
    %1317 = vsyncpa %s1316, 1

</llo_original>
